<compile_context>
chip_gen: v7x
topology: tpu7x:2x2x1
jax: 0.10.0
libtpu: 0.0.40
codegen_flags: <defaults>
</compile_context>

<pallas_src>
import jax
import jax.numpy as jnp
from jax.experimental import pallas as pl
from jax.experimental.pallas import tpu as pltpu


def clip_embedding_kernel(tok_ref, table_hbm, pos_ref, out_ref, gath, sem):
    # tok_ref:   (B, T) int32, SMEM (scalar prefetch)
    # table_hbm: (V, E) f32, HBM (no auto-DMA)
    # pos_ref:   (ROWS, E) f32, VMEM block of the position table for this row block
    # out_ref:   (1, ROWS, E) f32, VMEM output block
    # gath:      (ROWS, E) f32, VMEM scratch for gathered embedding rows
    # sem:       (ROWS,) DMA semaphores
    b = pl.program_id(0)
    t = pl.program_id(1)
    rows = gath.shape[0]
    t0 = t * rows

    # Issue all row-gather DMAs for this block concurrently (static unroll),
    # then wait. Out-of-range token ids would trip the DMA bounds check here
    # (closer to PyTorch's error behavior than the old silent-zero one-hot).
    copies = []
    for r in range(rows):
        tid = tok_ref[b, t0 + r]                      # scalar read from SMEM
        cp = pltpu.make_async_copy(
            table_hbm.at[pl.ds(tid, 1)],              # (1, E) row in HBM
            gath.at[pl.ds(r, 1)],                     # (1, E) row in VMEM
            sem.at[r])
        cp.start()
        copies.append(cp)
    for cp in copies:
        cp.wait()

    # Fused position add; single lane-dense store of the whole block.
    out_ref[0] = (gath[...] + pos_ref[...]).astype(out_ref.dtype)


def _pick_rows(T: int) -> int:
    # Prefer a row-block that is a multiple of 8 (sublane-aligned stores).
    for r in (32, 16, 8):
        if T % r == 0:
            return r
    # Fallback: largest divisor of T <= 32 (stores become masked; pad T to a
    # multiple of 8 upstream for peak write throughput).
    for r in range(min(T, 32), 0, -1):
        if T % r == 0:
            return r
    return 1


def clip_embedding(tokens, token_table, pos_table):
    B, T = tokens.shape
    V, E = token_table.shape
    assert pos_table.shape == (T, E)
    # TODO(synk): pad E to a multiple of 128 upstream if it is not already;
    # lane-dense output blocks are the biggest single perf lever on TPU.
    rows = _pick_rows(T)
    grid = (B, T // rows)

    bytes_accessed = (
        tokens.size * 4            # token ids (SMEM prefetch)
        + B * T * E * 4            # gathered embedding rows (HBM reads)
        + B * T * E * 4            # position slices (pipelined reads)
        + B * T * E * 4)           # output writeback
    cost = pl.CostEstimate(flops=B * T * E, transcendentals=0,
                           bytes_accessed=bytes_accessed)

    return pl.pallas_call(
        clip_embedding_kernel,
        out_shape=jax.ShapeDtypeStruct((B, T, E), token_table.dtype),
        grid_spec=pltpu.PrefetchScalarGridSpec(
            num_scalar_prefetch=1,                    # tokens -> SMEM
            grid=grid,
            in_specs=[
                pl.BlockSpec(memory_space=pl.ANY),                    # table in HBM
                pl.BlockSpec((rows, E), lambda b, t, tok: (t, 0)),    # pos slice
            ],
            out_specs=pl.BlockSpec((1, rows, E), lambda b, t, tok: (b, t, 0)),
            scratch_shapes=[
                pltpu.VMEM((rows, E), token_table.dtype),
                pltpu.SemaphoreType.DMA((rows,)),
            ],
        ),
        compiler_params=pltpu.CompilerParams(
            dimension_semantics=("parallel", "parallel")),
        cost_estimate=cost,
    )(tokens, token_table, pos_table)


if __name__ == "__main__":
    # Small, module-consistent shapes; E chosen lane-aligned (multiple of 128),
    # T a multiple of 8 so output blocks are (8k, 128m) and stores are unmasked.
    n_vocab, n_embd, n_token = 512, 128, 16
    batch = 2

    key = jax.random.PRNGKey(0)
    k_tok, k_emb, k_pos = jax.random.split(key, 3)

    tokens = jax.random.randint(k_tok, (batch, n_token), 0, n_vocab,
                                dtype=jnp.int32)
    # nn.Embedding default init ~ N(0,1); position_embedding is zeros in
    # __init__, but we use a deterministic random table so the add is exercised.
    token_table = jax.random.normal(k_emb, (n_vocab, n_embd), dtype=jnp.float32)
    pos_table = 0.02 * jax.random.normal(k_pos, (n_token, n_embd),
                                         dtype=jnp.float32)

    out = clip_embedding(tokens, token_table, pos_table)
    out = jax.block_until_ready(out)

    # Pure-JAX reference.
    ref = token_table[tokens] + pos_table[None, :, :]
    assert out.shape == (batch, n_token, n_embd)
    assert jnp.allclose(out, ref, atol=1e-6, rtol=1e-6), "mismatch vs reference"

    print("KERNEL_OK")
</pallas_src>

<mosaic_0001>
module attributes {stable_mosaic.version = 11 : i64} {
  func.func @clip_embedding_kernel(%arg0: i32, %arg1: i32, %arg2: memref<2x16xi32, #tpu.memory_space<smem>>, %arg3: memref<512x128xf32, #tpu.memory_space<any>>, %arg4: memref<16x128xf32, #tpu.memory_space<vmem>>, %arg5: memref<1x16x128xf32, #tpu.memory_space<vmem>>, %arg6: memref<16x128xf32, #tpu.memory_space<vmem>>, %arg7: memref<16x!tpu.dma_semaphore, #tpu.memory_space<semaphore_mem>>) attributes {dimension_semantics = [#tpu.dimension_semantics<parallel>, #tpu.dimension_semantics<parallel>], iteration_bounds = array<i64: 2, 1>, scalar_prefetch = 1 : i64, scratch_operands = 2 : i64, tpu.core_type = #tpu.core_type<tc>, window_params = [{}, {transform_indices = @transform_1, window_bounds = array<i64: 16, 128>}, {transform_indices = @transform_2, window_bounds = array<i64: 1, 16, 128>}]} {
    %c16_i32 = arith.constant 16 : i32
    %0 = arith.muli %arg1, %c16_i32 : i32
    %c0_i32 = arith.constant 0 : i32
    %1 = arith.addi %0, %c0_i32 : i32
    %2 = arith.index_cast %arg0 : i32 to index
    %3 = arith.index_cast %1 : i32 to index
    %4 = memref.load %arg2[%2, %3] : memref<2x16xi32, #tpu.memory_space<smem>>
    %c0_i32_0 = arith.constant 0 : i32
    %c0_i32_1 = arith.constant 0 : i32
    %5 = tpu.memref_slice %arg3[%4, %c0_i32_1] : memref<512x128xf32, #tpu.memory_space<any>> -> memref<1x128xf32, #tpu.memory_space<any>>
    %c0_i32_2 = arith.constant 0 : i32
    %c0_i32_3 = arith.constant 0 : i32
    %6 = tpu.memref_slice %arg6[%c0_i32_2, %c0_i32_3] : memref<16x128xf32, #tpu.memory_space<vmem>> -> memref<1x128xf32, #tpu.memory_space<vmem>>
    %7 = tpu.memref_slice %arg7[%c0_i32_0] : memref<16x!tpu.dma_semaphore, #tpu.memory_space<semaphore_mem>> -> memref<1x!tpu.dma_semaphore, #tpu.memory_space<semaphore_mem>>
    %8 = tpu.memref_squeeze %7 : memref<1x!tpu.dma_semaphore, #tpu.memory_space<semaphore_mem>> -> memref<!tpu.dma_semaphore, #tpu.memory_space<semaphore_mem>>
    tpu.enqueue_dma source(%5 : memref<1x128xf32, #tpu.memory_space<any>>) target(%6 : memref<1x128xf32, #tpu.memory_space<vmem>>) target_semaphore(%8 : memref<!tpu.dma_semaphore, #tpu.memory_space<semaphore_mem>>)
    %c1_i32 = arith.constant 1 : i32
    %9 = arith.addi %0, %c1_i32 : i32
    %10 = arith.index_cast %arg0 : i32 to index
    %11 = arith.index_cast %9 : i32 to index
    %12 = memref.load %arg2[%10, %11] : memref<2x16xi32, #tpu.memory_space<smem>>
    %c1_i32_4 = arith.constant 1 : i32
    %c0_i32_5 = arith.constant 0 : i32
    %13 = tpu.memref_slice %arg3[%12, %c0_i32_5] : memref<512x128xf32, #tpu.memory_space<any>> -> memref<1x128xf32, #tpu.memory_space<any>>
    %c1_i32_6 = arith.constant 1 : i32
    %c0_i32_7 = arith.constant 0 : i32
    %14 = tpu.memref_slice %arg6[%c1_i32_6, %c0_i32_7] : memref<16x128xf32, #tpu.memory_space<vmem>> -> memref<1x128xf32, #tpu.memory_space<vmem>>
    %15 = tpu.memref_slice %arg7[%c1_i32_4] : memref<16x!tpu.dma_semaphore, #tpu.memory_space<semaphore_mem>> -> memref<1x!tpu.dma_semaphore, #tpu.memory_space<semaphore_mem>>
    %16 = tpu.memref_squeeze %15 : memref<1x!tpu.dma_semaphore, #tpu.memory_space<semaphore_mem>> -> memref<!tpu.dma_semaphore, #tpu.memory_space<semaphore_mem>>
    tpu.enqueue_dma source(%13 : memref<1x128xf32, #tpu.memory_space<any>>) target(%14 : memref<1x128xf32, #tpu.memory_space<vmem>>) target_semaphore(%16 : memref<!tpu.dma_semaphore, #tpu.memory_space<semaphore_mem>>)
    %c2_i32 = arith.constant 2 : i32
    %17 = arith.addi %0, %c2_i32 : i32
    %18 = arith.index_cast %arg0 : i32 to index
    %19 = arith.index_cast %17 : i32 to index
    %20 = memref.load %arg2[%18, %19] : memref<2x16xi32, #tpu.memory_space<smem>>
    %c2_i32_8 = arith.constant 2 : i32
    %c0_i32_9 = arith.constant 0 : i32
    %21 = tpu.memref_slice %arg3[%20, %c0_i32_9] : memref<512x128xf32, #tpu.memory_space<any>> -> memref<1x128xf32, #tpu.memory_space<any>>
    %c2_i32_10 = arith.constant 2 : i32
    %c0_i32_11 = arith.constant 0 : i32
    %22 = tpu.memref_slice %arg6[%c2_i32_10, %c0_i32_11] : memref<16x128xf32, #tpu.memory_space<vmem>> -> memref<1x128xf32, #tpu.memory_space<vmem>>
    %23 = tpu.memref_slice %arg7[%c2_i32_8] : memref<16x!tpu.dma_semaphore, #tpu.memory_space<semaphore_mem>> -> memref<1x!tpu.dma_semaphore, #tpu.memory_space<semaphore_mem>>
    %24 = tpu.memref_squeeze %23 : memref<1x!tpu.dma_semaphore, #tpu.memory_space<semaphore_mem>> -> memref<!tpu.dma_semaphore, #tpu.memory_space<semaphore_mem>>
    tpu.enqueue_dma source(%21 : memref<1x128xf32, #tpu.memory_space<any>>) target(%22 : memref<1x128xf32, #tpu.memory_space<vmem>>) target_semaphore(%24 : memref<!tpu.dma_semaphore, #tpu.memory_space<semaphore_mem>>)
    %c3_i32 = arith.constant 3 : i32
    %25 = arith.addi %0, %c3_i32 : i32
    %26 = arith.index_cast %arg0 : i32 to index
    %27 = arith.index_cast %25 : i32 to index
    %28 = memref.load %arg2[%26, %27] : memref<2x16xi32, #tpu.memory_space<smem>>
    %c3_i32_12 = arith.constant 3 : i32
    %c0_i32_13 = arith.constant 0 : i32
    %29 = tpu.memref_slice %arg3[%28, %c0_i32_13] : memref<512x128xf32, #tpu.memory_space<any>> -> memref<1x128xf32, #tpu.memory_space<any>>
    %c3_i32_14 = arith.constant 3 : i32
    %c0_i32_15 = arith.constant 0 : i32
    %30 = tpu.memref_slice %arg6[%c3_i32_14, %c0_i32_15] : memref<16x128xf32, #tpu.memory_space<vmem>> -> memref<1x128xf32, #tpu.memory_space<vmem>>
    %31 = tpu.memref_slice %arg7[%c3_i32_12] : memref<16x!tpu.dma_semaphore, #tpu.memory_space<semaphore_mem>> -> memref<1x!tpu.dma_semaphore, #tpu.memory_space<semaphore_mem>>
    %32 = tpu.memref_squeeze %31 : memref<1x!tpu.dma_semaphore, #tpu.memory_space<semaphore_mem>> -> memref<!tpu.dma_semaphore, #tpu.memory_space<semaphore_mem>>
    tpu.enqueue_dma source(%29 : memref<1x128xf32, #tpu.memory_space<any>>) target(%30 : memref<1x128xf32, #tpu.memory_space<vmem>>) target_semaphore(%32 : memref<!tpu.dma_semaphore, #tpu.memory_space<semaphore_mem>>)
    %c4_i32 = arith.constant 4 : i32
    %33 = arith.addi %0, %c4_i32 : i32
    %34 = arith.index_cast %arg0 : i32 to index
    %35 = arith.index_cast %33 : i32 to index
    %36 = memref.load %arg2[%34, %35] : memref<2x16xi32, #tpu.memory_space<smem>>
    %c4_i32_16 = arith.constant 4 : i32
    %c0_i32_17 = arith.constant 0 : i32
    %37 = tpu.memref_slice %arg3[%36, %c0_i32_17] : memref<512x128xf32, #tpu.memory_space<any>> -> memref<1x128xf32, #tpu.memory_space<any>>
    %c4_i32_18 = arith.constant 4 : i32
    %c0_i32_19 = arith.constant 0 : i32
    %38 = tpu.memref_slice %arg6[%c4_i32_18, %c0_i32_19] : memref<16x128xf32, #tpu.memory_space<vmem>> -> memref<1x128xf32, #tpu.memory_space<vmem>>
    %39 = tpu.memref_slice %arg7[%c4_i32_16] : memref<16x!tpu.dma_semaphore, #tpu.memory_space<semaphore_mem>> -> memref<1x!tpu.dma_semaphore, #tpu.memory_space<semaphore_mem>>
    %40 = tpu.memref_squeeze %39 : memref<1x!tpu.dma_semaphore, #tpu.memory_space<semaphore_mem>> -> memref<!tpu.dma_semaphore, #tpu.memory_space<semaphore_mem>>
    tpu.enqueue_dma source(%37 : memref<1x128xf32, #tpu.memory_space<any>>) target(%38 : memref<1x128xf32, #tpu.memory_space<vmem>>) target_semaphore(%40 : memref<!tpu.dma_semaphore, #tpu.memory_space<semaphore_mem>>)
    %c5_i32 = arith.constant 5 : i32
    %41 = arith.addi %0, %c5_i32 : i32
    %42 = arith.index_cast %arg0 : i32 to index
    %43 = arith.index_cast %41 : i32 to index
    %44 = memref.load %arg2[%42, %43] : memref<2x16xi32, #tpu.memory_space<smem>>
    %c5_i32_20 = arith.constant 5 : i32
    %c0_i32_21 = arith.constant 0 : i32
    %45 = tpu.memref_slice %arg3[%44, %c0_i32_21] : memref<512x128xf32, #tpu.memory_space<any>> -> memref<1x128xf32, #tpu.memory_space<any>>
    %c5_i32_22 = arith.constant 5 : i32
    %c0_i32_23 = arith.constant 0 : i32
    %46 = tpu.memref_slice %arg6[%c5_i32_22, %c0_i32_23] : memref<16x128xf32, #tpu.memory_space<vmem>> -> memref<1x128xf32, #tpu.memory_space<vmem>>
    %47 = tpu.memref_slice %arg7[%c5_i32_20] : memref<16x!tpu.dma_semaphore, #tpu.memory_space<semaphore_mem>> -> memref<1x!tpu.dma_semaphore, #tpu.memory_space<semaphore_mem>>
    %48 = tpu.memref_squeeze %47 : memref<1x!tpu.dma_semaphore, #tpu.memory_space<semaphore_mem>> -> memref<!tpu.dma_semaphore, #tpu.memory_space<semaphore_mem>>
    tpu.enqueue_dma source(%45 : memref<1x128xf32, #tpu.memory_space<any>>) target(%46 : memref<1x128xf32, #tpu.memory_space<vmem>>) target_semaphore(%48 : memref<!tpu.dma_semaphore, #tpu.memory_space<semaphore_mem>>)
    %c6_i32 = arith.constant 6 : i32
    %49 = arith.addi %0, %c6_i32 : i32
    %50 = arith.index_cast %arg0 : i32 to index
    %51 = arith.index_cast %49 : i32 to index
    %52 = memref.load %arg2[%50, %51] : memref<2x16xi32, #tpu.memory_space<smem>>
    %c6_i32_24 = arith.constant 6 : i32
    %c0_i32_25 = arith.constant 0 : i32
    %53 = tpu.memref_slice %arg3[%52, %c0_i32_25] : memref<512x128xf32, #tpu.memory_space<any>> -> memref<1x128xf32, #tpu.memory_space<any>>
    %c6_i32_26 = arith.constant 6 : i32
    %c0_i32_27 = arith.constant 0 : i32
    %54 = tpu.memref_slice %arg6[%c6_i32_26, %c0_i32_27] : memref<16x128xf32, #tpu.memory_space<vmem>> -> memref<1x128xf32, #tpu.memory_space<vmem>>
    %55 = tpu.memref_slice %arg7[%c6_i32_24] : memref<16x!tpu.dma_semaphore, #tpu.memory_space<semaphore_mem>> -> memref<1x!tpu.dma_semaphore, #tpu.memory_space<semaphore_mem>>
    %56 = tpu.memref_squeeze %55 : memref<1x!tpu.dma_semaphore, #tpu.memory_space<semaphore_mem>> -> memref<!tpu.dma_semaphore, #tpu.memory_space<semaphore_mem>>
    tpu.enqueue_dma source(%53 : memref<1x128xf32, #tpu.memory_space<any>>) target(%54 : memref<1x128xf32, #tpu.memory_space<vmem>>) target_semaphore(%56 : memref<!tpu.dma_semaphore, #tpu.memory_space<semaphore_mem>>)
    %c7_i32 = arith.constant 7 : i32
    %57 = arith.addi %0, %c7_i32 : i32
    %58 = arith.index_cast %arg0 : i32 to index
    %59 = arith.index_cast %57 : i32 to index
    %60 = memref.load %arg2[%58, %59] : memref<2x16xi32, #tpu.memory_space<smem>>
    %c7_i32_28 = arith.constant 7 : i32
    %c0_i32_29 = arith.constant 0 : i32
    %61 = tpu.memref_slice %arg3[%60, %c0_i32_29] : memref<512x128xf32, #tpu.memory_space<any>> -> memref<1x128xf32, #tpu.memory_space<any>>
    %c7_i32_30 = arith.constant 7 : i32
    %c0_i32_31 = arith.constant 0 : i32
    %62 = tpu.memref_slice %arg6[%c7_i32_30, %c0_i32_31] : memref<16x128xf32, #tpu.memory_space<vmem>> -> memref<1x128xf32, #tpu.memory_space<vmem>>
    %63 = tpu.memref_slice %arg7[%c7_i32_28] : memref<16x!tpu.dma_semaphore, #tpu.memory_space<semaphore_mem>> -> memref<1x!tpu.dma_semaphore, #tpu.memory_space<semaphore_mem>>
    %64 = tpu.memref_squeeze %63 : memref<1x!tpu.dma_semaphore, #tpu.memory_space<semaphore_mem>> -> memref<!tpu.dma_semaphore, #tpu.memory_space<semaphore_mem>>
    tpu.enqueue_dma source(%61 : memref<1x128xf32, #tpu.memory_space<any>>) target(%62 : memref<1x128xf32, #tpu.memory_space<vmem>>) target_semaphore(%64 : memref<!tpu.dma_semaphore, #tpu.memory_space<semaphore_mem>>)
    %c8_i32 = arith.constant 8 : i32
    %65 = arith.addi %0, %c8_i32 : i32
    %66 = arith.index_cast %arg0 : i32 to index
    %67 = arith.index_cast %65 : i32 to index
    %68 = memref.load %arg2[%66, %67] : memref<2x16xi32, #tpu.memory_space<smem>>
    %c8_i32_32 = arith.constant 8 : i32
    %c0_i32_33 = arith.constant 0 : i32
    %69 = tpu.memref_slice %arg3[%68, %c0_i32_33] : memref<512x128xf32, #tpu.memory_space<any>> -> memref<1x128xf32, #tpu.memory_space<any>>
    %c8_i32_34 = arith.constant 8 : i32
    %c0_i32_35 = arith.constant 0 : i32
    %70 = tpu.memref_slice %arg6[%c8_i32_34, %c0_i32_35] : memref<16x128xf32, #tpu.memory_space<vmem>> -> memref<1x128xf32, #tpu.memory_space<vmem>>
    %71 = tpu.memref_slice %arg7[%c8_i32_32] : memref<16x!tpu.dma_semaphore, #tpu.memory_space<semaphore_mem>> -> memref<1x!tpu.dma_semaphore, #tpu.memory_space<semaphore_mem>>
    %72 = tpu.memref_squeeze %71 : memref<1x!tpu.dma_semaphore, #tpu.memory_space<semaphore_mem>> -> memref<!tpu.dma_semaphore, #tpu.memory_space<semaphore_mem>>
    tpu.enqueue_dma source(%69 : memref<1x128xf32, #tpu.memory_space<any>>) target(%70 : memref<1x128xf32, #tpu.memory_space<vmem>>) target_semaphore(%72 : memref<!tpu.dma_semaphore, #tpu.memory_space<semaphore_mem>>)
    %c9_i32 = arith.constant 9 : i32
    %73 = arith.addi %0, %c9_i32 : i32
    %74 = arith.index_cast %arg0 : i32 to index
    %75 = arith.index_cast %73 : i32 to index
    %76 = memref.load %arg2[%74, %75] : memref<2x16xi32, #tpu.memory_space<smem>>
    %c9_i32_36 = arith.constant 9 : i32
    %c0_i32_37 = arith.constant 0 : i32
    %77 = tpu.memref_slice %arg3[%76, %c0_i32_37] : memref<512x128xf32, #tpu.memory_space<any>> -> memref<1x128xf32, #tpu.memory_space<any>>
    %c9_i32_38 = arith.constant 9 : i32
    %c0_i32_39 = arith.constant 0 : i32
    %78 = tpu.memref_slice %arg6[%c9_i32_38, %c0_i32_39] : memref<16x128xf32, #tpu.memory_space<vmem>> -> memref<1x128xf32, #tpu.memory_space<vmem>>
    %79 = tpu.memref_slice %arg7[%c9_i32_36] : memref<16x!tpu.dma_semaphore, #tpu.memory_space<semaphore_mem>> -> memref<1x!tpu.dma_semaphore, #tpu.memory_space<semaphore_mem>>
    %80 = tpu.memref_squeeze %79 : memref<1x!tpu.dma_semaphore, #tpu.memory_space<semaphore_mem>> -> memref<!tpu.dma_semaphore, #tpu.memory_space<semaphore_mem>>
    tpu.enqueue_dma source(%77 : memref<1x128xf32, #tpu.memory_space<any>>) target(%78 : memref<1x128xf32, #tpu.memory_space<vmem>>) target_semaphore(%80 : memref<!tpu.dma_semaphore, #tpu.memory_space<semaphore_mem>>)
    %c10_i32 = arith.constant 10 : i32
    %81 = arith.addi %0, %c10_i32 : i32
    %82 = arith.index_cast %arg0 : i32 to index
    %83 = arith.index_cast %81 : i32 to index
    %84 = memref.load %arg2[%82, %83] : memref<2x16xi32, #tpu.memory_space<smem>>
    %c10_i32_40 = arith.constant 10 : i32
    %c0_i32_41 = arith.constant 0 : i32
    %85 = tpu.memref_slice %arg3[%84, %c0_i32_41] : memref<512x128xf32, #tpu.memory_space<any>> -> memref<1x128xf32, #tpu.memory_space<any>>
    %c10_i32_42 = arith.constant 10 : i32
    %c0_i32_43 = arith.constant 0 : i32
    %86 = tpu.memref_slice %arg6[%c10_i32_42, %c0_i32_43] : memref<16x128xf32, #tpu.memory_space<vmem>> -> memref<1x128xf32, #tpu.memory_space<vmem>>
    %87 = tpu.memref_slice %arg7[%c10_i32_40] : memref<16x!tpu.dma_semaphore, #tpu.memory_space<semaphore_mem>> -> memref<1x!tpu.dma_semaphore, #tpu.memory_space<semaphore_mem>>
    %88 = tpu.memref_squeeze %87 : memref<1x!tpu.dma_semaphore, #tpu.memory_space<semaphore_mem>> -> memref<!tpu.dma_semaphore, #tpu.memory_space<semaphore_mem>>
    tpu.enqueue_dma source(%85 : memref<1x128xf32, #tpu.memory_space<any>>) target(%86 : memref<1x128xf32, #tpu.memory_space<vmem>>) target_semaphore(%88 : memref<!tpu.dma_semaphore, #tpu.memory_space<semaphore_mem>>)
    %c11_i32 = arith.constant 11 : i32
    %89 = arith.addi %0, %c11_i32 : i32
    %90 = arith.index_cast %arg0 : i32 to index
    %91 = arith.index_cast %89 : i32 to index
    %92 = memref.load %arg2[%90, %91] : memref<2x16xi32, #tpu.memory_space<smem>>
    %c11_i32_44 = arith.constant 11 : i32
    %c0_i32_45 = arith.constant 0 : i32
    %93 = tpu.memref_slice %arg3[%92, %c0_i32_45] : memref<512x128xf32, #tpu.memory_space<any>> -> memref<1x128xf32, #tpu.memory_space<any>>
    %c11_i32_46 = arith.constant 11 : i32
    %c0_i32_47 = arith.constant 0 : i32
    %94 = tpu.memref_slice %arg6[%c11_i32_46, %c0_i32_47] : memref<16x128xf32, #tpu.memory_space<vmem>> -> memref<1x128xf32, #tpu.memory_space<vmem>>
    %95 = tpu.memref_slice %arg7[%c11_i32_44] : memref<16x!tpu.dma_semaphore, #tpu.memory_space<semaphore_mem>> -> memref<1x!tpu.dma_semaphore, #tpu.memory_space<semaphore_mem>>
    %96 = tpu.memref_squeeze %95 : memref<1x!tpu.dma_semaphore, #tpu.memory_space<semaphore_mem>> -> memref<!tpu.dma_semaphore, #tpu.memory_space<semaphore_mem>>
    tpu.enqueue_dma source(%93 : memref<1x128xf32, #tpu.memory_space<any>>) target(%94 : memref<1x128xf32, #tpu.memory_space<vmem>>) target_semaphore(%96 : memref<!tpu.dma_semaphore, #tpu.memory_space<semaphore_mem>>)
    %c12_i32 = arith.constant 12 : i32
    %97 = arith.addi %0, %c12_i32 : i32
    %98 = arith.index_cast %arg0 : i32 to index
    %99 = arith.index_cast %97 : i32 to index
    %100 = memref.load %arg2[%98, %99] : memref<2x16xi32, #tpu.memory_space<smem>>
    %c12_i32_48 = arith.constant 12 : i32
    %c0_i32_49 = arith.constant 0 : i32
    %101 = tpu.memref_slice %arg3[%100, %c0_i32_49] : memref<512x128xf32, #tpu.memory_space<any>> -> memref<1x128xf32, #tpu.memory_space<any>>
    %c12_i32_50 = arith.constant 12 : i32
    %c0_i32_51 = arith.constant 0 : i32
    %102 = tpu.memref_slice %arg6[%c12_i32_50, %c0_i32_51] : memref<16x128xf32, #tpu.memory_space<vmem>> -> memref<1x128xf32, #tpu.memory_space<vmem>>
    %103 = tpu.memref_slice %arg7[%c12_i32_48] : memref<16x!tpu.dma_semaphore, #tpu.memory_space<semaphore_mem>> -> memref<1x!tpu.dma_semaphore, #tpu.memory_space<semaphore_mem>>
    %104 = tpu.memref_squeeze %103 : memref<1x!tpu.dma_semaphore, #tpu.memory_space<semaphore_mem>> -> memref<!tpu.dma_semaphore, #tpu.memory_space<semaphore_mem>>
    tpu.enqueue_dma source(%101 : memref<1x128xf32, #tpu.memory_space<any>>) target(%102 : memref<1x128xf32, #tpu.memory_space<vmem>>) target_semaphore(%104 : memref<!tpu.dma_semaphore, #tpu.memory_space<semaphore_mem>>)
    %c13_i32 = arith.constant 13 : i32
    %105 = arith.addi %0, %c13_i32 : i32
    %106 = arith.index_cast %arg0 : i32 to index
    %107 = arith.index_cast %105 : i32 to index
    %108 = memref.load %arg2[%106, %107] : memref<2x16xi32, #tpu.memory_space<smem>>
    %c13_i32_52 = arith.constant 13 : i32
    %c0_i32_53 = arith.constant 0 : i32
    %109 = tpu.memref_slice %arg3[%108, %c0_i32_53] : memref<512x128xf32, #tpu.memory_space<any>> -> memref<1x128xf32, #tpu.memory_space<any>>
    %c13_i32_54 = arith.constant 13 : i32
    %c0_i32_55 = arith.constant 0 : i32
    %110 = tpu.memref_slice %arg6[%c13_i32_54, %c0_i32_55] : memref<16x128xf32, #tpu.memory_space<vmem>> -> memref<1x128xf32, #tpu.memory_space<vmem>>
    %111 = tpu.memref_slice %arg7[%c13_i32_52] : memref<16x!tpu.dma_semaphore, #tpu.memory_space<semaphore_mem>> -> memref<1x!tpu.dma_semaphore, #tpu.memory_space<semaphore_mem>>
    %112 = tpu.memref_squeeze %111 : memref<1x!tpu.dma_semaphore, #tpu.memory_space<semaphore_mem>> -> memref<!tpu.dma_semaphore, #tpu.memory_space<semaphore_mem>>
    tpu.enqueue_dma source(%109 : memref<1x128xf32, #tpu.memory_space<any>>) target(%110 : memref<1x128xf32, #tpu.memory_space<vmem>>) target_semaphore(%112 : memref<!tpu.dma_semaphore, #tpu.memory_space<semaphore_mem>>)
    %c14_i32 = arith.constant 14 : i32
    %113 = arith.addi %0, %c14_i32 : i32
    %114 = arith.index_cast %arg0 : i32 to index
    %115 = arith.index_cast %113 : i32 to index
    %116 = memref.load %arg2[%114, %115] : memref<2x16xi32, #tpu.memory_space<smem>>
    %c14_i32_56 = arith.constant 14 : i32
    %c0_i32_57 = arith.constant 0 : i32
    %117 = tpu.memref_slice %arg3[%116, %c0_i32_57] : memref<512x128xf32, #tpu.memory_space<any>> -> memref<1x128xf32, #tpu.memory_space<any>>
    %c14_i32_58 = arith.constant 14 : i32
    %c0_i32_59 = arith.constant 0 : i32
    %118 = tpu.memref_slice %arg6[%c14_i32_58, %c0_i32_59] : memref<16x128xf32, #tpu.memory_space<vmem>> -> memref<1x128xf32, #tpu.memory_space<vmem>>
    %119 = tpu.memref_slice %arg7[%c14_i32_56] : memref<16x!tpu.dma_semaphore, #tpu.memory_space<semaphore_mem>> -> memref<1x!tpu.dma_semaphore, #tpu.memory_space<semaphore_mem>>
    %120 = tpu.memref_squeeze %119 : memref<1x!tpu.dma_semaphore, #tpu.memory_space<semaphore_mem>> -> memref<!tpu.dma_semaphore, #tpu.memory_space<semaphore_mem>>
    tpu.enqueue_dma source(%117 : memref<1x128xf32, #tpu.memory_space<any>>) target(%118 : memref<1x128xf32, #tpu.memory_space<vmem>>) target_semaphore(%120 : memref<!tpu.dma_semaphore, #tpu.memory_space<semaphore_mem>>)
    %c15_i32 = arith.constant 15 : i32
    %121 = arith.addi %0, %c15_i32 : i32
    %122 = arith.index_cast %arg0 : i32 to index
    %123 = arith.index_cast %121 : i32 to index
    %124 = memref.load %arg2[%122, %123] : memref<2x16xi32, #tpu.memory_space<smem>>
    %c15_i32_60 = arith.constant 15 : i32
    %c0_i32_61 = arith.constant 0 : i32
    %125 = tpu.memref_slice %arg3[%124, %c0_i32_61] : memref<512x128xf32, #tpu.memory_space<any>> -> memref<1x128xf32, #tpu.memory_space<any>>
    %c15_i32_62 = arith.constant 15 : i32
    %c0_i32_63 = arith.constant 0 : i32
    %126 = tpu.memref_slice %arg6[%c15_i32_62, %c0_i32_63] : memref<16x128xf32, #tpu.memory_space<vmem>> -> memref<1x128xf32, #tpu.memory_space<vmem>>
    %127 = tpu.memref_slice %arg7[%c15_i32_60] : memref<16x!tpu.dma_semaphore, #tpu.memory_space<semaphore_mem>> -> memref<1x!tpu.dma_semaphore, #tpu.memory_space<semaphore_mem>>
    %128 = tpu.memref_squeeze %127 : memref<1x!tpu.dma_semaphore, #tpu.memory_space<semaphore_mem>> -> memref<!tpu.dma_semaphore, #tpu.memory_space<semaphore_mem>>
    tpu.enqueue_dma source(%125 : memref<1x128xf32, #tpu.memory_space<any>>) target(%126 : memref<1x128xf32, #tpu.memory_space<vmem>>) target_semaphore(%128 : memref<!tpu.dma_semaphore, #tpu.memory_space<semaphore_mem>>)
    %c0_i32_64 = arith.constant 0 : i32
    %c0_i32_65 = arith.constant 0 : i32
    %129 = tpu.memref_slice %arg3[%4, %c0_i32_65] : memref<512x128xf32, #tpu.memory_space<any>> -> memref<1x128xf32, #tpu.memory_space<any>>
    %c0_i32_66 = arith.constant 0 : i32
    %c0_i32_67 = arith.constant 0 : i32
    %130 = tpu.memref_slice %arg6[%c0_i32_66, %c0_i32_67] : memref<16x128xf32, #tpu.memory_space<vmem>> -> memref<1x128xf32, #tpu.memory_space<vmem>>
    %131 = tpu.memref_slice %arg7[%c0_i32_64] : memref<16x!tpu.dma_semaphore, #tpu.memory_space<semaphore_mem>> -> memref<1x!tpu.dma_semaphore, #tpu.memory_space<semaphore_mem>>
    %132 = tpu.memref_squeeze %131 : memref<1x!tpu.dma_semaphore, #tpu.memory_space<semaphore_mem>> -> memref<!tpu.dma_semaphore, #tpu.memory_space<semaphore_mem>>
    tpu.wait_dma2 semaphore(%132 : memref<!tpu.dma_semaphore, #tpu.memory_space<semaphore_mem>>) src(%129 : memref<1x128xf32, #tpu.memory_space<any>>) dst(%130 : memref<1x128xf32, #tpu.memory_space<vmem>>)
    %c1_i32_68 = arith.constant 1 : i32
    %c0_i32_69 = arith.constant 0 : i32
    %133 = tpu.memref_slice %arg3[%12, %c0_i32_69] : memref<512x128xf32, #tpu.memory_space<any>> -> memref<1x128xf32, #tpu.memory_space<any>>
    %c1_i32_70 = arith.constant 1 : i32
    %c0_i32_71 = arith.constant 0 : i32
    %134 = tpu.memref_slice %arg6[%c1_i32_70, %c0_i32_71] : memref<16x128xf32, #tpu.memory_space<vmem>> -> memref<1x128xf32, #tpu.memory_space<vmem>>
    %135 = tpu.memref_slice %arg7[%c1_i32_68] : memref<16x!tpu.dma_semaphore, #tpu.memory_space<semaphore_mem>> -> memref<1x!tpu.dma_semaphore, #tpu.memory_space<semaphore_mem>>
    %136 = tpu.memref_squeeze %135 : memref<1x!tpu.dma_semaphore, #tpu.memory_space<semaphore_mem>> -> memref<!tpu.dma_semaphore, #tpu.memory_space<semaphore_mem>>
    tpu.wait_dma2 semaphore(%136 : memref<!tpu.dma_semaphore, #tpu.memory_space<semaphore_mem>>) src(%133 : memref<1x128xf32, #tpu.memory_space<any>>) dst(%134 : memref<1x128xf32, #tpu.memory_space<vmem>>)
    %c2_i32_72 = arith.constant 2 : i32
    %c0_i32_73 = arith.constant 0 : i32
    %137 = tpu.memref_slice %arg3[%20, %c0_i32_73] : memref<512x128xf32, #tpu.memory_space<any>> -> memref<1x128xf32, #tpu.memory_space<any>>
    %c2_i32_74 = arith.constant 2 : i32
    %c0_i32_75 = arith.constant 0 : i32
    %138 = tpu.memref_slice %arg6[%c2_i32_74, %c0_i32_75] : memref<16x128xf32, #tpu.memory_space<vmem>> -> memref<1x128xf32, #tpu.memory_space<vmem>>
    %139 = tpu.memref_slice %arg7[%c2_i32_72] : memref<16x!tpu.dma_semaphore, #tpu.memory_space<semaphore_mem>> -> memref<1x!tpu.dma_semaphore, #tpu.memory_space<semaphore_mem>>
    %140 = tpu.memref_squeeze %139 : memref<1x!tpu.dma_semaphore, #tpu.memory_space<semaphore_mem>> -> memref<!tpu.dma_semaphore, #tpu.memory_space<semaphore_mem>>
    tpu.wait_dma2 semaphore(%140 : memref<!tpu.dma_semaphore, #tpu.memory_space<semaphore_mem>>) src(%137 : memref<1x128xf32, #tpu.memory_space<any>>) dst(%138 : memref<1x128xf32, #tpu.memory_space<vmem>>)
    %c3_i32_76 = arith.constant 3 : i32
    %c0_i32_77 = arith.constant 0 : i32
    %141 = tpu.memref_slice %arg3[%28, %c0_i32_77] : memref<512x128xf32, #tpu.memory_space<any>> -> memref<1x128xf32, #tpu.memory_space<any>>
    %c3_i32_78 = arith.constant 3 : i32
    %c0_i32_79 = arith.constant 0 : i32
    %142 = tpu.memref_slice %arg6[%c3_i32_78, %c0_i32_79] : memref<16x128xf32, #tpu.memory_space<vmem>> -> memref<1x128xf32, #tpu.memory_space<vmem>>
    %143 = tpu.memref_slice %arg7[%c3_i32_76] : memref<16x!tpu.dma_semaphore, #tpu.memory_space<semaphore_mem>> -> memref<1x!tpu.dma_semaphore, #tpu.memory_space<semaphore_mem>>
    %144 = tpu.memref_squeeze %143 : memref<1x!tpu.dma_semaphore, #tpu.memory_space<semaphore_mem>> -> memref<!tpu.dma_semaphore, #tpu.memory_space<semaphore_mem>>
    tpu.wait_dma2 semaphore(%144 : memref<!tpu.dma_semaphore, #tpu.memory_space<semaphore_mem>>) src(%141 : memref<1x128xf32, #tpu.memory_space<any>>) dst(%142 : memref<1x128xf32, #tpu.memory_space<vmem>>)
    %c4_i32_80 = arith.constant 4 : i32
    %c0_i32_81 = arith.constant 0 : i32
    %145 = tpu.memref_slice %arg3[%36, %c0_i32_81] : memref<512x128xf32, #tpu.memory_space<any>> -> memref<1x128xf32, #tpu.memory_space<any>>
    %c4_i32_82 = arith.constant 4 : i32
    %c0_i32_83 = arith.constant 0 : i32
    %146 = tpu.memref_slice %arg6[%c4_i32_82, %c0_i32_83] : memref<16x128xf32, #tpu.memory_space<vmem>> -> memref<1x128xf32, #tpu.memory_space<vmem>>
    %147 = tpu.memref_slice %arg7[%c4_i32_80] : memref<16x!tpu.dma_semaphore, #tpu.memory_space<semaphore_mem>> -> memref<1x!tpu.dma_semaphore, #tpu.memory_space<semaphore_mem>>
    %148 = tpu.memref_squeeze %147 : memref<1x!tpu.dma_semaphore, #tpu.memory_space<semaphore_mem>> -> memref<!tpu.dma_semaphore, #tpu.memory_space<semaphore_mem>>
    tpu.wait_dma2 semaphore(%148 : memref<!tpu.dma_semaphore, #tpu.memory_space<semaphore_mem>>) src(%145 : memref<1x128xf32, #tpu.memory_space<any>>) dst(%146 : memref<1x128xf32, #tpu.memory_space<vmem>>)
    %c5_i32_84 = arith.constant 5 : i32
    %c0_i32_85 = arith.constant 0 : i32
    %149 = tpu.memref_slice %arg3[%44, %c0_i32_85] : memref<512x128xf32, #tpu.memory_space<any>> -> memref<1x128xf32, #tpu.memory_space<any>>
    %c5_i32_86 = arith.constant 5 : i32
    %c0_i32_87 = arith.constant 0 : i32
    %150 = tpu.memref_slice %arg6[%c5_i32_86, %c0_i32_87] : memref<16x128xf32, #tpu.memory_space<vmem>> -> memref<1x128xf32, #tpu.memory_space<vmem>>
    %151 = tpu.memref_slice %arg7[%c5_i32_84] : memref<16x!tpu.dma_semaphore, #tpu.memory_space<semaphore_mem>> -> memref<1x!tpu.dma_semaphore, #tpu.memory_space<semaphore_mem>>
    %152 = tpu.memref_squeeze %151 : memref<1x!tpu.dma_semaphore, #tpu.memory_space<semaphore_mem>> -> memref<!tpu.dma_semaphore, #tpu.memory_space<semaphore_mem>>
    tpu.wait_dma2 semaphore(%152 : memref<!tpu.dma_semaphore, #tpu.memory_space<semaphore_mem>>) src(%149 : memref<1x128xf32, #tpu.memory_space<any>>) dst(%150 : memref<1x128xf32, #tpu.memory_space<vmem>>)
    %c6_i32_88 = arith.constant 6 : i32
    %c0_i32_89 = arith.constant 0 : i32
    %153 = tpu.memref_slice %arg3[%52, %c0_i32_89] : memref<512x128xf32, #tpu.memory_space<any>> -> memref<1x128xf32, #tpu.memory_space<any>>
    %c6_i32_90 = arith.constant 6 : i32
    %c0_i32_91 = arith.constant 0 : i32
    %154 = tpu.memref_slice %arg6[%c6_i32_90, %c0_i32_91] : memref<16x128xf32, #tpu.memory_space<vmem>> -> memref<1x128xf32, #tpu.memory_space<vmem>>
    %155 = tpu.memref_slice %arg7[%c6_i32_88] : memref<16x!tpu.dma_semaphore, #tpu.memory_space<semaphore_mem>> -> memref<1x!tpu.dma_semaphore, #tpu.memory_space<semaphore_mem>>
    %156 = tpu.memref_squeeze %155 : memref<1x!tpu.dma_semaphore, #tpu.memory_space<semaphore_mem>> -> memref<!tpu.dma_semaphore, #tpu.memory_space<semaphore_mem>>
    tpu.wait_dma2 semaphore(%156 : memref<!tpu.dma_semaphore, #tpu.memory_space<semaphore_mem>>) src(%153 : memref<1x128xf32, #tpu.memory_space<any>>) dst(%154 : memref<1x128xf32, #tpu.memory_space<vmem>>)
    %c7_i32_92 = arith.constant 7 : i32
    %c0_i32_93 = arith.constant 0 : i32
    %157 = tpu.memref_slice %arg3[%60, %c0_i32_93] : memref<512x128xf32, #tpu.memory_space<any>> -> memref<1x128xf32, #tpu.memory_space<any>>
    %c7_i32_94 = arith.constant 7 : i32
    %c0_i32_95 = arith.constant 0 : i32
    %158 = tpu.memref_slice %arg6[%c7_i32_94, %c0_i32_95] : memref<16x128xf32, #tpu.memory_space<vmem>> -> memref<1x128xf32, #tpu.memory_space<vmem>>
    %159 = tpu.memref_slice %arg7[%c7_i32_92] : memref<16x!tpu.dma_semaphore, #tpu.memory_space<semaphore_mem>> -> memref<1x!tpu.dma_semaphore, #tpu.memory_space<semaphore_mem>>
    %160 = tpu.memref_squeeze %159 : memref<1x!tpu.dma_semaphore, #tpu.memory_space<semaphore_mem>> -> memref<!tpu.dma_semaphore, #tpu.memory_space<semaphore_mem>>
    tpu.wait_dma2 semaphore(%160 : memref<!tpu.dma_semaphore, #tpu.memory_space<semaphore_mem>>) src(%157 : memref<1x128xf32, #tpu.memory_space<any>>) dst(%158 : memref<1x128xf32, #tpu.memory_space<vmem>>)
    %c8_i32_96 = arith.constant 8 : i32
    %c0_i32_97 = arith.constant 0 : i32
    %161 = tpu.memref_slice %arg3[%68, %c0_i32_97] : memref<512x128xf32, #tpu.memory_space<any>> -> memref<1x128xf32, #tpu.memory_space<any>>
    %c8_i32_98 = arith.constant 8 : i32
    %c0_i32_99 = arith.constant 0 : i32
    %162 = tpu.memref_slice %arg6[%c8_i32_98, %c0_i32_99] : memref<16x128xf32, #tpu.memory_space<vmem>> -> memref<1x128xf32, #tpu.memory_space<vmem>>
    %163 = tpu.memref_slice %arg7[%c8_i32_96] : memref<16x!tpu.dma_semaphore, #tpu.memory_space<semaphore_mem>> -> memref<1x!tpu.dma_semaphore, #tpu.memory_space<semaphore_mem>>
    %164 = tpu.memref_squeeze %163 : memref<1x!tpu.dma_semaphore, #tpu.memory_space<semaphore_mem>> -> memref<!tpu.dma_semaphore, #tpu.memory_space<semaphore_mem>>
    tpu.wait_dma2 semaphore(%164 : memref<!tpu.dma_semaphore, #tpu.memory_space<semaphore_mem>>) src(%161 : memref<1x128xf32, #tpu.memory_space<any>>) dst(%162 : memref<1x128xf32, #tpu.memory_space<vmem>>)
    %c9_i32_100 = arith.constant 9 : i32
    %c0_i32_101 = arith.constant 0 : i32
    %165 = tpu.memref_slice %arg3[%76, %c0_i32_101] : memref<512x128xf32, #tpu.memory_space<any>> -> memref<1x128xf32, #tpu.memory_space<any>>
    %c9_i32_102 = arith.constant 9 : i32
    %c0_i32_103 = arith.constant 0 : i32
    %166 = tpu.memref_slice %arg6[%c9_i32_102, %c0_i32_103] : memref<16x128xf32, #tpu.memory_space<vmem>> -> memref<1x128xf32, #tpu.memory_space<vmem>>
    %167 = tpu.memref_slice %arg7[%c9_i32_100] : memref<16x!tpu.dma_semaphore, #tpu.memory_space<semaphore_mem>> -> memref<1x!tpu.dma_semaphore, #tpu.memory_space<semaphore_mem>>
    %168 = tpu.memref_squeeze %167 : memref<1x!tpu.dma_semaphore, #tpu.memory_space<semaphore_mem>> -> memref<!tpu.dma_semaphore, #tpu.memory_space<semaphore_mem>>
    tpu.wait_dma2 semaphore(%168 : memref<!tpu.dma_semaphore, #tpu.memory_space<semaphore_mem>>) src(%165 : memref<1x128xf32, #tpu.memory_space<any>>) dst(%166 : memref<1x128xf32, #tpu.memory_space<vmem>>)
    %c10_i32_104 = arith.constant 10 : i32
    %c0_i32_105 = arith.constant 0 : i32
    %169 = tpu.memref_slice %arg3[%84, %c0_i32_105] : memref<512x128xf32, #tpu.memory_space<any>> -> memref<1x128xf32, #tpu.memory_space<any>>
    %c10_i32_106 = arith.constant 10 : i32
    %c0_i32_107 = arith.constant 0 : i32
    %170 = tpu.memref_slice %arg6[%c10_i32_106, %c0_i32_107] : memref<16x128xf32, #tpu.memory_space<vmem>> -> memref<1x128xf32, #tpu.memory_space<vmem>>
    %171 = tpu.memref_slice %arg7[%c10_i32_104] : memref<16x!tpu.dma_semaphore, #tpu.memory_space<semaphore_mem>> -> memref<1x!tpu.dma_semaphore, #tpu.memory_space<semaphore_mem>>
    %172 = tpu.memref_squeeze %171 : memref<1x!tpu.dma_semaphore, #tpu.memory_space<semaphore_mem>> -> memref<!tpu.dma_semaphore, #tpu.memory_space<semaphore_mem>>
    tpu.wait_dma2 semaphore(%172 : memref<!tpu.dma_semaphore, #tpu.memory_space<semaphore_mem>>) src(%169 : memref<1x128xf32, #tpu.memory_space<any>>) dst(%170 : memref<1x128xf32, #tpu.memory_space<vmem>>)
    %c11_i32_108 = arith.constant 11 : i32
    %c0_i32_109 = arith.constant 0 : i32
    %173 = tpu.memref_slice %arg3[%92, %c0_i32_109] : memref<512x128xf32, #tpu.memory_space<any>> -> memref<1x128xf32, #tpu.memory_space<any>>
    %c11_i32_110 = arith.constant 11 : i32
    %c0_i32_111 = arith.constant 0 : i32
    %174 = tpu.memref_slice %arg6[%c11_i32_110, %c0_i32_111] : memref<16x128xf32, #tpu.memory_space<vmem>> -> memref<1x128xf32, #tpu.memory_space<vmem>>
    %175 = tpu.memref_slice %arg7[%c11_i32_108] : memref<16x!tpu.dma_semaphore, #tpu.memory_space<semaphore_mem>> -> memref<1x!tpu.dma_semaphore, #tpu.memory_space<semaphore_mem>>
    %176 = tpu.memref_squeeze %175 : memref<1x!tpu.dma_semaphore, #tpu.memory_space<semaphore_mem>> -> memref<!tpu.dma_semaphore, #tpu.memory_space<semaphore_mem>>
    tpu.wait_dma2 semaphore(%176 : memref<!tpu.dma_semaphore, #tpu.memory_space<semaphore_mem>>) src(%173 : memref<1x128xf32, #tpu.memory_space<any>>) dst(%174 : memref<1x128xf32, #tpu.memory_space<vmem>>)
    %c12_i32_112 = arith.constant 12 : i32
    %c0_i32_113 = arith.constant 0 : i32
    %177 = tpu.memref_slice %arg3[%100, %c0_i32_113] : memref<512x128xf32, #tpu.memory_space<any>> -> memref<1x128xf32, #tpu.memory_space<any>>
    %c12_i32_114 = arith.constant 12 : i32
    %c0_i32_115 = arith.constant 0 : i32
    %178 = tpu.memref_slice %arg6[%c12_i32_114, %c0_i32_115] : memref<16x128xf32, #tpu.memory_space<vmem>> -> memref<1x128xf32, #tpu.memory_space<vmem>>
    %179 = tpu.memref_slice %arg7[%c12_i32_112] : memref<16x!tpu.dma_semaphore, #tpu.memory_space<semaphore_mem>> -> memref<1x!tpu.dma_semaphore, #tpu.memory_space<semaphore_mem>>
    %180 = tpu.memref_squeeze %179 : memref<1x!tpu.dma_semaphore, #tpu.memory_space<semaphore_mem>> -> memref<!tpu.dma_semaphore, #tpu.memory_space<semaphore_mem>>
    tpu.wait_dma2 semaphore(%180 : memref<!tpu.dma_semaphore, #tpu.memory_space<semaphore_mem>>) src(%177 : memref<1x128xf32, #tpu.memory_space<any>>) dst(%178 : memref<1x128xf32, #tpu.memory_space<vmem>>)
    %c13_i32_116 = arith.constant 13 : i32
    %c0_i32_117 = arith.constant 0 : i32
    %181 = tpu.memref_slice %arg3[%108, %c0_i32_117] : memref<512x128xf32, #tpu.memory_space<any>> -> memref<1x128xf32, #tpu.memory_space<any>>
    %c13_i32_118 = arith.constant 13 : i32
    %c0_i32_119 = arith.constant 0 : i32
    %182 = tpu.memref_slice %arg6[%c13_i32_118, %c0_i32_119] : memref<16x128xf32, #tpu.memory_space<vmem>> -> memref<1x128xf32, #tpu.memory_space<vmem>>
    %183 = tpu.memref_slice %arg7[%c13_i32_116] : memref<16x!tpu.dma_semaphore, #tpu.memory_space<semaphore_mem>> -> memref<1x!tpu.dma_semaphore, #tpu.memory_space<semaphore_mem>>
    %184 = tpu.memref_squeeze %183 : memref<1x!tpu.dma_semaphore, #tpu.memory_space<semaphore_mem>> -> memref<!tpu.dma_semaphore, #tpu.memory_space<semaphore_mem>>
    tpu.wait_dma2 semaphore(%184 : memref<!tpu.dma_semaphore, #tpu.memory_space<semaphore_mem>>) src(%181 : memref<1x128xf32, #tpu.memory_space<any>>) dst(%182 : memref<1x128xf32, #tpu.memory_space<vmem>>)
    %c14_i32_120 = arith.constant 14 : i32
    %c0_i32_121 = arith.constant 0 : i32
    %185 = tpu.memref_slice %arg3[%116, %c0_i32_121] : memref<512x128xf32, #tpu.memory_space<any>> -> memref<1x128xf32, #tpu.memory_space<any>>
    %c14_i32_122 = arith.constant 14 : i32
    %c0_i32_123 = arith.constant 0 : i32
    %186 = tpu.memref_slice %arg6[%c14_i32_122, %c0_i32_123] : memref<16x128xf32, #tpu.memory_space<vmem>> -> memref<1x128xf32, #tpu.memory_space<vmem>>
    %187 = tpu.memref_slice %arg7[%c14_i32_120] : memref<16x!tpu.dma_semaphore, #tpu.memory_space<semaphore_mem>> -> memref<1x!tpu.dma_semaphore, #tpu.memory_space<semaphore_mem>>
    %188 = tpu.memref_squeeze %187 : memref<1x!tpu.dma_semaphore, #tpu.memory_space<semaphore_mem>> -> memref<!tpu.dma_semaphore, #tpu.memory_space<semaphore_mem>>
    tpu.wait_dma2 semaphore(%188 : memref<!tpu.dma_semaphore, #tpu.memory_space<semaphore_mem>>) src(%185 : memref<1x128xf32, #tpu.memory_space<any>>) dst(%186 : memref<1x128xf32, #tpu.memory_space<vmem>>)
    %c15_i32_124 = arith.constant 15 : i32
    %c0_i32_125 = arith.constant 0 : i32
    %189 = tpu.memref_slice %arg3[%124, %c0_i32_125] : memref<512x128xf32, #tpu.memory_space<any>> -> memref<1x128xf32, #tpu.memory_space<any>>
    %c15_i32_126 = arith.constant 15 : i32
    %c0_i32_127 = arith.constant 0 : i32
    %190 = tpu.memref_slice %arg6[%c15_i32_126, %c0_i32_127] : memref<16x128xf32, #tpu.memory_space<vmem>> -> memref<1x128xf32, #tpu.memory_space<vmem>>
    %191 = tpu.memref_slice %arg7[%c15_i32_124] : memref<16x!tpu.dma_semaphore, #tpu.memory_space<semaphore_mem>> -> memref<1x!tpu.dma_semaphore, #tpu.memory_space<semaphore_mem>>
    %192 = tpu.memref_squeeze %191 : memref<1x!tpu.dma_semaphore, #tpu.memory_space<semaphore_mem>> -> memref<!tpu.dma_semaphore, #tpu.memory_space<semaphore_mem>>
    tpu.wait_dma2 semaphore(%192 : memref<!tpu.dma_semaphore, #tpu.memory_space<semaphore_mem>>) src(%189 : memref<1x128xf32, #tpu.memory_space<any>>) dst(%190 : memref<1x128xf32, #tpu.memory_space<vmem>>)
    %c0 = arith.constant 0 : index
    %c0_128 = arith.constant 0 : index
    %193 = vector.load %arg6[%c0, %c0_128] : memref<16x128xf32, #tpu.memory_space<vmem>>, vector<16x128xf32>
    %c0_129 = arith.constant 0 : index
    %c0_130 = arith.constant 0 : index
    %194 = vector.load %arg4[%c0_129, %c0_130] : memref<16x128xf32, #tpu.memory_space<vmem>>, vector<16x128xf32>
    %195 = arith.addf %193, %194 : vector<16x128xf32>
    %c0_131 = arith.constant 0 : index
    %c0_132 = arith.constant 0 : index
    %c0_133 = arith.constant 0 : index
    %196 = vector.load %arg5[%c0_131, %c0_132, %c0_133] : memref<1x16x128xf32, #tpu.memory_space<vmem>>, vector<1x16x128xf32>
    %197 = vector.shape_cast %196 : vector<1x16x128xf32> to vector<16x128xf32>
    %198 = vector.shape_cast %195 : vector<16x128xf32> to vector<1x16x128xf32>
    tpu.vector_store %arg5[%c0_131, %c0_132, %c0_133], %198 {strides = array<i32>} : memref<1x16x128xf32, #tpu.memory_space<vmem>>, vector<1x16x128xf32>,
    return
  }
  func.func @transform_1(%arg0: i32, %arg1: i32, %arg2: memref<2x16xi32, #tpu.memory_space<smem>>) -> (i32, i32) {
    %c0_i32 = arith.constant 0 : i32
    %c0_i32_0 = arith.constant 0 : i32
    return %arg1, %c0_i32 : i32, i32
  }
  func.func @transform_2(%arg0: i32, %arg1: i32, %arg2: memref<2x16xi32, #tpu.memory_space<smem>>) -> (i32, i32, i32) {
    %c0_i32 = arith.constant 0 : i32
    %c0_i32_0 = arith.constant 0 : i32
    return %arg0, %arg1, %c0_i32 : i32, i32, i32
  }
}

</mosaic_0001>

<llo_original>
// kernel: tpu_custom_call.1
$region0: #{tpu_custom_call.1}
  #allocation0 [shape = 'u32[]', space=smem, size = 0x4, offset = 0x4, fixed_abs, tag = 'smem constant byte address 0x4 - core index']
  #allocation1 [shape = 'u32[144,128]{1,0:T(1,128)}', space=vmem, size = 0x12000, scoped, tag = 'internal scratch']
  #allocation2 [shape = 'f32[16,128]{1,0:T(8,128)}', space=vmem, size = 0x2000, scoped, tag = 'scratch operand']
  #allocation3 [shape = 's32[16]{0}', space=sflag, size = 0x40, scoped, tag = 'scratch operand']
  #allocation4 [shape = 's32[1]{0}', space=sflag, size = 0x4, scoped, tag = 'scoped memory for tpu_custom_call.1']
  #allocation5 [shape = 'u8[1024]{0}', space=smem, size = 0x400, scoped, tag = 'prefetched SMEM operand 0']
  #allocation10 [shape = 's32[]', space=sflag, size = 0x4, offset = 0, fixed_abs, tag = 'sflag constant byte address 0x0 - dummy sync flag']
  #allocation11 [shape = 's32[]', space=sflag, size = 0x4, offset = 0, fixed_abs, tag = 'sflag constant byte address 0x0 - dummy sync flag']
  #allocation12 [shape = 'u32[]', space=smem, size = 0x4, offset = 0x44, fixed_abs, tag = 'smem constant byte address 0x44 - assertion arg 0']
  #allocation13 [shape = 'u32[]', space=smem, size = 0x4, offset = 0x48, fixed_abs, tag = 'smem constant byte address 0x48 - assertion arg 1']
  #allocation14 [shape = 's32[]', space=sflag, size = 0x4, offset = 0, fixed_abs, tag = 'sflag constant byte address 0x0 - dummy sync flag']
  #allocation15 [shape = 's32[]', space=sflag, size = 0x4, offset = 0, fixed_abs, tag = 'sflag constant byte address 0x0 - dummy sync flag']
  #allocation16 [shape = 's32[]', space=sflag, size = 0x4, offset = 0, fixed_abs, tag = 'sflag constant byte address 0x0 - dummy sync flag']
  #allocation17 [shape = 's32[]', space=sflag, size = 0x4, offset = 0, fixed_abs, tag = 'sflag constant byte address 0x0 - dummy sync flag']
  #allocation18 [shape = 's32[]', space=sflag, size = 0x4, offset = 0, fixed_abs, tag = 'sflag constant byte address 0x0 - dummy sync flag']
  #allocation19 [shape = 's32[]', space=sflag, size = 0x4, offset = 0, fixed_abs, tag = 'sflag constant byte address 0x0 - dummy sync flag']
  #allocation20 [shape = 's32[]', space=sflag, size = 0x4, offset = 0, fixed_abs, tag = 'sflag constant byte address 0x0 - dummy sync flag']
  #allocation21 [shape = 's32[]', space=sflag, size = 0x4, offset = 0, fixed_abs, tag = 'sflag constant byte address 0x0 - dummy sync flag']
  #allocation22 [shape = 's32[]', space=sflag, size = 0x4, offset = 0, fixed_abs, tag = 'sflag constant byte address 0x0 - dummy sync flag']
  #allocation23 [shape = 's32[]', space=sflag, size = 0x4, offset = 0, fixed_abs, tag = 'sflag constant byte address 0x0 - dummy sync flag']
  #allocation24 [shape = 's32[]', space=sflag, size = 0x4, offset = 0, fixed_abs, tag = 'sflag constant byte address 0x0 - dummy sync flag']
  #allocation25 [shape = 's32[]', space=sflag, size = 0x4, offset = 0, fixed_abs, tag = 'sflag constant byte address 0x0 - dummy sync flag']
  #allocation26 [shape = 's32[]', space=sflag, size = 0x4, offset = 0, fixed_abs, tag = 'sflag constant byte address 0x0 - dummy sync flag']
  #allocation27 [shape = 's32[]', space=sflag, size = 0x4, offset = 0, fixed_abs, tag = 'sflag constant byte address 0x0 - dummy sync flag']
  #allocation28 [shape = 's32[]', space=sflag, size = 0x4, offset = 0, fixed_abs, tag = 'sflag constant byte address 0x0 - dummy sync flag']
  #allocation29 [shape = 's32[]', space=sflag, size = 0x4, offset = 0, fixed_abs, tag = 'sflag constant byte address 0x0 - dummy sync flag']
  #allocation30 [shape = 's32[]', space=sflag, size = 0x4, offset = 0, fixed_abs, tag = 'sflag constant byte address 0x0 - dummy sync flag']
  #allocation31 [shape = 's32[]', space=sflag, size = 0x4, offset = 0, fixed_abs, tag = 'sflag constant byte address 0x0 - dummy sync flag']
  #allocation32 [shape = 's32[]', space=sflag, size = 0x4, offset = 0, fixed_abs, tag = 'sflag constant byte address 0x0 - dummy sync flag']
  #allocation33 [shape = 's32[]', space=sflag, size = 0x4, offset = 0, fixed_abs, tag = 'sflag constant byte address 0x0 - dummy sync flag']
  #allocation34 [shape = 's32[]', space=sflag, size = 0x4, offset = 0, fixed_abs, tag = 'sflag constant byte address 0x0 - dummy sync flag']
  #allocation35 [shape = 's32[]', space=sflag, size = 0x4, offset = 0, fixed_abs, tag = 'sflag constant byte address 0x0 - dummy sync flag']
  #allocation36 [shape = 's32[]', space=sflag, size = 0x4, offset = 0, fixed_abs, tag = 'sflag constant byte address 0x0 - dummy sync flag']
  #allocation37 [shape = 's32[]', space=sflag, size = 0x4, offset = 0, fixed_abs, tag = 'sflag constant byte address 0x0 - dummy sync flag']
  #allocation38 [shape = 's32[]', space=sflag, size = 0x4, offset = 0, fixed_abs, tag = 'sflag constant byte address 0x0 - dummy sync flag']
  #allocation39 [shape = 's32[]', space=sflag, size = 0x4, offset = 0, fixed_abs, tag = 'sflag constant byte address 0x0 - dummy sync flag']
  #allocation40 [shape = 's32[]', space=sflag, size = 0x4, offset = 0, fixed_abs, tag = 'sflag constant byte address 0x0 - dummy sync flag']
  #allocation41 [shape = 's32[]', space=sflag, size = 0x4, offset = 0, fixed_abs, tag = 'sflag constant byte address 0x0 - dummy sync flag']
  #allocation42 [shape = 's32[]', space=sflag, size = 0x4, offset = 0, fixed_abs, tag = 'sflag constant byte address 0x0 - dummy sync flag']
  #allocation43 [shape = 's32[]', space=sflag, size = 0x4, offset = 0, fixed_abs, tag = 'sflag constant byte address 0x0 - dummy sync flag']
  %s0 = inlined_call_operand.hbm [shape: s32[2,16], index: 0, kind: input, shape index: {}]
  %s1 = inlined_call_operand.hbm [shape: f32[512,128], index: 1, kind: input, shape index: {}]
  %s2 = inlined_call_operand.hbm [shape: f32[16,128], index: 2, kind: input, shape index: {}]
  %s3 = inlined_call_operand.hbm [shape: f32[2,16,128], index: 3, kind: output, shape index: {}]
  %s4 = sld [smem:[#allocation0]]
  $region105: #{tpu_custom_call.1} parent=0
    _
  %s6 = ssub.s32 1, %s4
  %s7 = scalar_select 0, %s6, %s4
  %9 = dma.hbm_to_smem %s0, 32, [#allocation5], [#allocation4]
  %10 = dma.done [#allocation4], 32
  %11 = sfence
  $region1: #{tpu_custom_call.1} parent=0
    #allocation6 [shape = 'u8[8192]{0}', space=vmem, size = 0x2000, scoped, tag = 'input window, operand 2, single buffered']
    #allocation7 [shape = 's32[2]{0}', space=sflag, size = 0x8, scoped, tag = 'scoped memory for tpu_custom_call.1']
    #allocation8 [shape = 's32[2]{0}', space=sflag, size = 0x8, scoped, tag = 'scoped memory for tpu_custom_call.1']
    #allocation9 [shape = 'u8[16384]{0}', space=vmem, size = 0x4000, scoped, tag = 'output window, operand 0']
    %12 = vsyncpa [#allocation7], 0
    %13 = vsyncpa [#allocation8], 0
    %s14 = scalar_lea.sflag [#allocation8], 1
    %15 = vsyncpa %s14, 0
    loop: start=0, step=1, limit=4
    $region2: #{tpu_custom_call.1} parent=1 // loop_pre_header
      _
    $region3: #{tpu_custom_call.1} parent=1 // loop_header
      %s17 = sphi 0, %s21
      %p18 = scmp.ge.s32.totalorder %s17, 4
      %s24 = sphi 0, %s36
      %s25 = sphi 0, %s32
      %s26 = sphi 0, %s24
      %s27 = sphi 0, %s25
      %s28 = sphi 0, %s26
      %s29 = sphi 0, %s27
      %s39 = sphi 0, %s41
      %s42 = sphi 0, %s39
      %s43 = sphi 0, %s42
      %s59 = sphi 0, %s43
      %s67 = sphi 0, %s69
      %s70 = sphi 0, %s67
      %s71 = sphi 0, %s70
      %s87 = sphi 0, %s71
    $region4: #{tpu_custom_call.1} parent=1 // loop_header_branch
      %20 = sbr.rel (%p18) target = $region8
    $region5: #{tpu_custom_call.1} parent=1 // loop_body
      %s22 = ssub.s32 %s17, 1
      %s23 = ssub.s32 %s17, 2
      %s30 = sadd.s32 1, %s25
      %p31 = scmp.ge.s32.totalorder %s30, 1
      %s32 = scalar_select %p31, 0, %s30
      %s33 = sadd.s32 1, %s24
      %s34 = scalar_select %p31, %s33, %s24
      %p35 = scmp.ge.s32.totalorder %s34, 2
      %s36 = scalar_select %p35, 0, %s34
      %s37 = ssub.s32 %s25, %s32
      %p38 = scmp.eq.s32.totalorder %s37, 0
      %s40 = sadd.s32 %s39, 1
      %s41 = scalar_select %p38, %s39, %s40
      %p44 = pneg %p38
      %p45 = scmp.eq.s32.totalorder %s17, 1
      %p46 = por %p44, %p45
      %p47 = scmp.ne.s32.totalorder %s39, %s42
      %p48 = scmp.eq.s32.totalorder %s17, 0
      %p49 = por %p47, %p48
      %p50 = scmp.ne.s32.totalorder %s39, %s42
      %p51 = scmp.eq.s32.totalorder %s22, 1
      %p52 = por %p50, %p51
      %p53 = scmp.ne.s32.totalorder %s42, %s43
      %p54 = scmp.eq.s32.totalorder %s22, 0
      %p55 = por %p53, %p54
      %p56 = scmp.ne.s32.totalorder %s42, %s43
      %p57 = scmp.eq.s32.totalorder %s23, 1
      %p58 = por %p56, %p57
      %p60 = scmp.ne.s32.totalorder %s43, %s59
      %p61 = scmp.eq.s32.totalorder %s23, 0
      %p62 = por %p60, %p61
      %s63 = ssub.s32 %s24, %s36
      %s64 = ssub.s32 %s25, %s32
      %s65 = sor.u32 %s63, %s64
      %p66 = scmp.eq.s32.totalorder %s65, 0
      %s68 = sadd.s32 %s67, 1
      %s69 = scalar_select %p66, %s67, %s68
      %p72 = pneg %p66
      %p73 = scmp.eq.s32.totalorder %s17, 1
      %p74 = por %p72, %p73
      %p75 = scmp.ne.s32.totalorder %s67, %s70
      %p76 = scmp.eq.s32.totalorder %s17, 0
      %p77 = por %p75, %p76
      %p78 = scmp.ne.s32.totalorder %s67, %s70
      %p79 = scmp.eq.s32.totalorder %s22, 1
      %p80 = por %p78, %p79
      %p81 = scmp.ne.s32.totalorder %s70, %s71
      %p82 = scmp.eq.s32.totalorder %s22, 0
      %p83 = por %p81, %p82
      %p84 = scmp.ne.s32.totalorder %s70, %s71
      %p85 = scmp.eq.s32.totalorder %s23, 1
      %p86 = por %p84, %p85
      %p88 = scmp.ne.s32.totalorder %s71, %s87
      %p89 = scmp.eq.s32.totalorder %s23, 0
      %p90 = por %p88, %p89
      %p91 = scmp.le.s32.totalorder 1, %s17
      %p92 = scmp.lt.s32.totalorder %s17, 3
      %p93 = pnand %p91, %p92
      %p94 = pneg %p93
      // Predicated region
      $region9: #{tpu_custom_call.1} parent=5 // pred_check
        _
      $region10: #{tpu_custom_call.1} parent=5 // pred_check_branch
        %96 = sbr.rel (%p93) target = $region12
      $region11: #{tpu_custom_call.1} parent=5 // pred_region
        %s97 = ssub.s32 %s17, 1
        // Predicated region
        $region13: #{tpu_custom_call.1} parent=11 // pred_check
          %p98 = pneg %p55
        $region14: #{tpu_custom_call.1} parent=11 // pred_check_branch
          %100 = sbr.rel (%p98) target = $region16
        $region15: #{tpu_custom_call.1} parent=11 // pred_region
          %s101 = smul.u32 2, %s27
          %s103 = ssub.s32 256, 256
          %104 = vsyncadd [#allocation7], %s103
          %s105 = smul.addr %s101, 128
          %s106 = scalar_lea.hbm %s2, %s105
          %s107 = sshll.u32 [#allocation6], 4
          %s108 = int_to_ptr.vmem [resolvable:$true] %s107
          %113 = dma.hbm_to_vmem [thread:$0]  %s106, 256, %s108, [#allocation7], 128, 128, 8
        $region16: #{tpu_custom_call.1} parent=11 // pred_fallthru
          _
      $region12: #{tpu_custom_call.1} parent=5 // pred_fallthru
        _
      %p114 = scmp.lt.s32.totalorder %s17, 2
      // Predicated region
      $region17: #{tpu_custom_call.1} parent=5 // pred_check
        %p115 = pneg %p114
      $region18: #{tpu_custom_call.1} parent=5 // pred_check_branch
        %117 = sbr.rel (%p115) target = $region20
      $region19: #{tpu_custom_call.1} parent=5 // pred_region
        _
      $region20: #{tpu_custom_call.1} parent=5 // pred_fallthru
        _
      %p118 = scmp.le.s32.totalorder 1, %s17
      %p119 = scmp.lt.s32.totalorder %s17, 3
      %p120 = pnand %p118, %p119
      %p121 = pneg %p120
      // Predicated region
      $region21: #{tpu_custom_call.1} parent=5 // pred_check
        _
      $region22: #{tpu_custom_call.1} parent=5 // pred_check_branch
        %123 = sbr.rel (%p120) target = $region24
      $region23: #{tpu_custom_call.1} parent=5 // pred_region
        %s124 = ssub.s32 %s17, 1
        // Predicated region
        $region25: #{tpu_custom_call.1} parent=23 // pred_check
          %p125 = pneg %p55
        $region26: #{tpu_custom_call.1} parent=23 // pred_check_branch
          %127 = sbr.rel (%p125) target = $region28
        $region27: #{tpu_custom_call.1} parent=23 // pred_region
          %128 = dma.done [#allocation7], 256
        $region28: #{tpu_custom_call.1} parent=23 // pred_fallthru
          _
        %p129 = pneg %p55
        %p130 = pneg %p52
        %p131 = pneg %p83
        %p132 = pneg %p80
        %s133 = sand.u32 %s70, 1
        %s134 = scalar_lea.sflag [#allocation8], %s133
        %s135 = sand.u32 %s70, 1
        %s136 = smul.addr %s135, 16
        %s137 = scalar_lea.vmem [#allocation9], %s136
        %s138 = smul.u32 2, %s27
        %s139 = smul.u32 2, %s27
        %s140 = smul.u32 %s27, 16
        %s141 = sshra.s32 %s140, 7
        %s142 = sand.u32 %s140, 127
        %s143 = sadd.s32 %s141, %s26
        %s144 = smul.u32 %s143, 128
        %s145 = sshra.s32 %s140, 7
        %s146 = sand.u32 %s140, 127
        %s147 = sadd.s32 %s144, %s146
        %s148 = sld [smem:[#allocation5 + %s147]]
        %s149 = smul.addr %s148, 16
        %s150 = scalar_lea.hbm %s1, %s149
        // Predicated region
        $region29: #{tpu_custom_call.1} parent=23 // pred_check
          _
        $region30: #{tpu_custom_call.1} parent=23 // pred_check_branch
          %152 = sbr.rel target = $region32
        $region31: #{tpu_custom_call.1} parent=23 // pred_region
          %153 = sst [smem:[#allocation12]] [#allocation11]
          %154 = sst [smem:[#allocation13]] [#allocation10]
        $region32: #{tpu_custom_call.1} parent=23 // pred_fallthru
          _
        %156 = shalt.err (0)
        %s158 = sshll.u32 [#allocation2], 4
        %s159 = int_to_ptr.vmem [resolvable:$true] %s158
        %161 = dma.hbm_to_vmem [thread:$0]  %s150, 16, %s159, [#allocation3]
        %s162 = sadd.s32 %s140, 1
        %s163 = sshra.s32 %s162, 7
        %s164 = sand.u32 %s162, 127
        %s165 = sadd.s32 %s163, %s26
        %s166 = smul.u32 %s165, 128
        %s167 = sshra.s32 %s162, 7
        %s168 = sand.u32 %s162, 127
        %s169 = sadd.s32 %s166, %s168
        %s170 = sld [smem:[#allocation5 + %s169]]
        %s171 = smul.addr %s170, 16
        %s172 = scalar_lea.hbm %s1, %s171
        %s173 = scalar_lea.vmem [#allocation2], 1
        %s174 = scalar_lea.sflag [#allocation3], 1
        // Predicated region
        $region33: #{tpu_custom_call.1} parent=23 // pred_check
          _
        $region34: #{tpu_custom_call.1} parent=23 // pred_check_branch
          %176 = sbr.rel target = $region36
        $region35: #{tpu_custom_call.1} parent=23 // pred_region
          %177 = sst [smem:[#allocation12]] [#allocation15]
          %178 = sst [smem:[#allocation13]] [#allocation14]
        $region36: #{tpu_custom_call.1} parent=23 // pred_fallthru
          _
        %180 = shalt.err (0)
        %s182 = sshll.u32 %s173, 4
        %s183 = int_to_ptr.vmem [resolvable:$true] %s182
        %185 = dma.hbm_to_vmem [thread:$0]  %s172, 16, %s183, %s174
        %s186 = sadd.s32 %s140, 2
        %s187 = sshra.s32 %s186, 7
        %s188 = sand.u32 %s186, 127
        %s189 = sadd.s32 %s187, %s26
        %s190 = smul.u32 %s189, 128
        %s191 = sshra.s32 %s186, 7
        %s192 = sand.u32 %s186, 127
        %s193 = sadd.s32 %s190, %s192
        %s194 = sld [smem:[#allocation5 + %s193]]
        %s195 = smul.addr %s194, 16
        %s196 = scalar_lea.hbm %s1, %s195
        %s197 = scalar_lea.vmem [#allocation2], 2
        %s198 = scalar_lea.sflag [#allocation3], 2
        // Predicated region
        $region37: #{tpu_custom_call.1} parent=23 // pred_check
          _
        $region38: #{tpu_custom_call.1} parent=23 // pred_check_branch
          %200 = sbr.rel target = $region40
        $region39: #{tpu_custom_call.1} parent=23 // pred_region
          %201 = sst [smem:[#allocation12]] [#allocation17]
          %202 = sst [smem:[#allocation13]] [#allocation16]
        $region40: #{tpu_custom_call.1} parent=23 // pred_fallthru
          _
        %204 = shalt.err (0)
        %s206 = sshll.u32 %s197, 4
        %s207 = int_to_ptr.vmem [resolvable:$true] %s206
        %209 = dma.hbm_to_vmem [thread:$0]  %s196, 16, %s207, %s198
        %s210 = sadd.s32 %s140, 3
        %s211 = sshra.s32 %s210, 7
        %s212 = sand.u32 %s210, 127
        %s213 = sadd.s32 %s211, %s26
        %s214 = smul.u32 %s213, 128
        %s215 = sshra.s32 %s210, 7
        %s216 = sand.u32 %s210, 127
        %s217 = sadd.s32 %s214, %s216
        %s218 = sld [smem:[#allocation5 + %s217]]
        %s219 = smul.addr %s218, 16
        %s220 = scalar_lea.hbm %s1, %s219
        %s221 = scalar_lea.vmem [#allocation2], 3
        %s222 = scalar_lea.sflag [#allocation3], 3
        // Predicated region
        $region41: #{tpu_custom_call.1} parent=23 // pred_check
          _
        $region42: #{tpu_custom_call.1} parent=23 // pred_check_branch
          %224 = sbr.rel target = $region44
        $region43: #{tpu_custom_call.1} parent=23 // pred_region
          %225 = sst [smem:[#allocation12]] [#allocation19]
          %226 = sst [smem:[#allocation13]] [#allocation18]
        $region44: #{tpu_custom_call.1} parent=23 // pred_fallthru
          _
        %228 = shalt.err (0)
        %s230 = sshll.u32 %s221, 4
        %s231 = int_to_ptr.vmem [resolvable:$true] %s230
        %233 = dma.hbm_to_vmem [thread:$0]  %s220, 16, %s231, %s222
        %s234 = sadd.s32 %s140, 4
        %s235 = sshra.s32 %s234, 7
        %s236 = sand.u32 %s234, 127
        %s237 = sadd.s32 %s235, %s26
        %s238 = smul.u32 %s237, 128
        %s239 = sshra.s32 %s234, 7
        %s240 = sand.u32 %s234, 127
        %s241 = sadd.s32 %s238, %s240
        %s242 = sld [smem:[#allocation5 + %s241]]
        %s243 = smul.addr %s242, 16
        %s244 = scalar_lea.hbm %s1, %s243
        %s245 = scalar_lea.vmem [#allocation2], 4
        %s246 = scalar_lea.sflag [#allocation3], 4
        // Predicated region
        $region45: #{tpu_custom_call.1} parent=23 // pred_check
          _
        $region46: #{tpu_custom_call.1} parent=23 // pred_check_branch
          %248 = sbr.rel target = $region48
        $region47: #{tpu_custom_call.1} parent=23 // pred_region
          %249 = sst [smem:[#allocation12]] [#allocation21]
          %250 = sst [smem:[#allocation13]] [#allocation20]
        $region48: #{tpu_custom_call.1} parent=23 // pred_fallthru
          _
        %252 = shalt.err (0)
        %s254 = sshll.u32 %s245, 4
        %s255 = int_to_ptr.vmem [resolvable:$true] %s254
        %257 = dma.hbm_to_vmem [thread:$0]  %s244, 16, %s255, %s246
        %s258 = sadd.s32 %s140, 5
        %s259 = sshra.s32 %s258, 7
        %s260 = sand.u32 %s258, 127
        %s261 = sadd.s32 %s259, %s26
        %s262 = smul.u32 %s261, 128
        %s263 = sshra.s32 %s258, 7
        %s264 = sand.u32 %s258, 127
        %s265 = sadd.s32 %s262, %s264
        %s266 = sld [smem:[#allocation5 + %s265]]
        %s267 = smul.addr %s266, 16
        %s268 = scalar_lea.hbm %s1, %s267
        %s269 = scalar_lea.vmem [#allocation2], 5
        %s270 = scalar_lea.sflag [#allocation3], 5
        // Predicated region
        $region49: #{tpu_custom_call.1} parent=23 // pred_check
          _
        $region50: #{tpu_custom_call.1} parent=23 // pred_check_branch
          %272 = sbr.rel target = $region52
        $region51: #{tpu_custom_call.1} parent=23 // pred_region
          %273 = sst [smem:[#allocation12]] [#allocation23]
          %274 = sst [smem:[#allocation13]] [#allocation22]
        $region52: #{tpu_custom_call.1} parent=23 // pred_fallthru
          _
        %276 = shalt.err (0)
        %s278 = sshll.u32 %s269, 4
        %s279 = int_to_ptr.vmem [resolvable:$true] %s278
        %281 = dma.hbm_to_vmem [thread:$0]  %s268, 16, %s279, %s270
        %s282 = sadd.s32 %s140, 6
        %s283 = sshra.s32 %s282, 7
        %s284 = sand.u32 %s282, 127
        %s285 = sadd.s32 %s283, %s26
        %s286 = smul.u32 %s285, 128
        %s287 = sshra.s32 %s282, 7
        %s288 = sand.u32 %s282, 127
        %s289 = sadd.s32 %s286, %s288
        %s290 = sld [smem:[#allocation5 + %s289]]
        %s291 = smul.addr %s290, 16
        %s292 = scalar_lea.hbm %s1, %s291
        %s293 = scalar_lea.vmem [#allocation2], 6
        %s294 = scalar_lea.sflag [#allocation3], 6
        // Predicated region
        $region53: #{tpu_custom_call.1} parent=23 // pred_check
          _
        $region54: #{tpu_custom_call.1} parent=23 // pred_check_branch
          %296 = sbr.rel target = $region56
        $region55: #{tpu_custom_call.1} parent=23 // pred_region
          %297 = sst [smem:[#allocation12]] [#allocation25]
          %298 = sst [smem:[#allocation13]] [#allocation24]
        $region56: #{tpu_custom_call.1} parent=23 // pred_fallthru
          _
        %300 = shalt.err (0)
        %s302 = sshll.u32 %s293, 4
        %s303 = int_to_ptr.vmem [resolvable:$true] %s302
        %305 = dma.hbm_to_vmem [thread:$0]  %s292, 16, %s303, %s294
        %s306 = sadd.s32 %s140, 7
        %s307 = sshra.s32 %s306, 7
        %s308 = sand.u32 %s306, 127
        %s309 = sadd.s32 %s307, %s26
        %s310 = smul.u32 %s309, 128
        %s311 = sshra.s32 %s306, 7
        %s312 = sand.u32 %s306, 127
        %s313 = sadd.s32 %s310, %s312
        %s314 = sld [smem:[#allocation5 + %s313]]
        %s315 = smul.addr %s314, 16
        %s316 = scalar_lea.hbm %s1, %s315
        %s317 = scalar_lea.vmem [#allocation2], 7
        %s318 = scalar_lea.sflag [#allocation3], 7
        // Predicated region
        $region57: #{tpu_custom_call.1} parent=23 // pred_check
          _
        $region58: #{tpu_custom_call.1} parent=23 // pred_check_branch
          %320 = sbr.rel target = $region60
        $region59: #{tpu_custom_call.1} parent=23 // pred_region
          %321 = sst [smem:[#allocation12]] [#allocation27]
          %322 = sst [smem:[#allocation13]] [#allocation26]
        $region60: #{tpu_custom_call.1} parent=23 // pred_fallthru
          _
        %324 = shalt.err (0)
        %s326 = sshll.u32 %s317, 4
        %s327 = int_to_ptr.vmem [resolvable:$true] %s326
        %329 = dma.hbm_to_vmem [thread:$0]  %s316, 16, %s327, %s318
        %s330 = sadd.s32 %s140, 8
        %s331 = sshra.s32 %s330, 7
        %s332 = sand.u32 %s330, 127
        %s333 = sadd.s32 %s331, %s26
        %s334 = smul.u32 %s333, 128
        %s335 = sshra.s32 %s330, 7
        %s336 = sand.u32 %s330, 127
        %s337 = sadd.s32 %s334, %s336
        %s338 = sld [smem:[#allocation5 + %s337]]
        %s339 = smul.addr %s338, 16
        %s340 = scalar_lea.hbm %s1, %s339
        %s341 = scalar_lea.vmem [#allocation2], 8
        %s342 = scalar_lea.sflag [#allocation3], 8
        // Predicated region
        $region61: #{tpu_custom_call.1} parent=23 // pred_check
          _
        $region62: #{tpu_custom_call.1} parent=23 // pred_check_branch
          %344 = sbr.rel target = $region64
        $region63: #{tpu_custom_call.1} parent=23 // pred_region
          %345 = sst [smem:[#allocation12]] [#allocation29]
          %346 = sst [smem:[#allocation13]] [#allocation28]
        $region64: #{tpu_custom_call.1} parent=23 // pred_fallthru
          _
        %348 = shalt.err (0)
        %s350 = sshll.u32 %s341, 4
        %s351 = int_to_ptr.vmem [resolvable:$true] %s350
        %353 = dma.hbm_to_vmem [thread:$0]  %s340, 16, %s351, %s342
        %s354 = sadd.s32 %s140, 9
        %s355 = sshra.s32 %s354, 7
        %s356 = sand.u32 %s354, 127
        %s357 = sadd.s32 %s355, %s26
        %s358 = smul.u32 %s357, 128
        %s359 = sshra.s32 %s354, 7
        %s360 = sand.u32 %s354, 127
        %s361 = sadd.s32 %s358, %s360
        %s362 = sld [smem:[#allocation5 + %s361]]
        %s363 = smul.addr %s362, 16
        %s364 = scalar_lea.hbm %s1, %s363
        %s365 = scalar_lea.vmem [#allocation2], 9
        %s366 = scalar_lea.sflag [#allocation3], 9
        // Predicated region
        $region65: #{tpu_custom_call.1} parent=23 // pred_check
          _
        $region66: #{tpu_custom_call.1} parent=23 // pred_check_branch
          %368 = sbr.rel target = $region68
        $region67: #{tpu_custom_call.1} parent=23 // pred_region
          %369 = sst [smem:[#allocation12]] [#allocation31]
          %370 = sst [smem:[#allocation13]] [#allocation30]
        $region68: #{tpu_custom_call.1} parent=23 // pred_fallthru
          _
        %372 = shalt.err (0)
        %s374 = sshll.u32 %s365, 4
        %s375 = int_to_ptr.vmem [resolvable:$true] %s374
        %377 = dma.hbm_to_vmem [thread:$0]  %s364, 16, %s375, %s366
        %s378 = sadd.s32 %s140, 10
        %s379 = sshra.s32 %s378, 7
        %s380 = sand.u32 %s378, 127
        %s381 = sadd.s32 %s379, %s26
        %s382 = smul.u32 %s381, 128
        %s383 = sshra.s32 %s378, 7
        %s384 = sand.u32 %s378, 127
        %s385 = sadd.s32 %s382, %s384
        %s386 = sld [smem:[#allocation5 + %s385]]
        %s387 = smul.addr %s386, 16
        %s388 = scalar_lea.hbm %s1, %s387
        %s389 = scalar_lea.vmem [#allocation2], 10
        %s390 = scalar_lea.sflag [#allocation3], 10
        // Predicated region
        $region69: #{tpu_custom_call.1} parent=23 // pred_check
          _
        $region70: #{tpu_custom_call.1} parent=23 // pred_check_branch
          %392 = sbr.rel target = $region72
        $region71: #{tpu_custom_call.1} parent=23 // pred_region
          %393 = sst [smem:[#allocation12]] [#allocation33]
          %394 = sst [smem:[#allocation13]] [#allocation32]
        $region72: #{tpu_custom_call.1} parent=23 // pred_fallthru
          _
        %396 = shalt.err (0)
        %s398 = sshll.u32 %s389, 4
        %s399 = int_to_ptr.vmem [resolvable:$true] %s398
        %401 = dma.hbm_to_vmem [thread:$0]  %s388, 16, %s399, %s390
        %s402 = sadd.s32 %s140, 11
        %s403 = sshra.s32 %s402, 7
        %s404 = sand.u32 %s402, 127
        %s405 = sadd.s32 %s403, %s26
        %s406 = smul.u32 %s405, 128
        %s407 = sshra.s32 %s402, 7
        %s408 = sand.u32 %s402, 127
        %s409 = sadd.s32 %s406, %s408
        %s410 = sld [smem:[#allocation5 + %s409]]
        %s411 = smul.addr %s410, 16
        %s412 = scalar_lea.hbm %s1, %s411
        %s413 = scalar_lea.vmem [#allocation2], 11
        %s414 = scalar_lea.sflag [#allocation3], 11
        // Predicated region
        $region73: #{tpu_custom_call.1} parent=23 // pred_check
          _
        $region74: #{tpu_custom_call.1} parent=23 // pred_check_branch
          %416 = sbr.rel target = $region76
        $region75: #{tpu_custom_call.1} parent=23 // pred_region
          %417 = sst [smem:[#allocation12]] [#allocation35]
          %418 = sst [smem:[#allocation13]] [#allocation34]
        $region76: #{tpu_custom_call.1} parent=23 // pred_fallthru
          _
        %420 = shalt.err (0)
        %s422 = sshll.u32 %s413, 4
        %s423 = int_to_ptr.vmem [resolvable:$true] %s422
        %425 = dma.hbm_to_vmem [thread:$0]  %s412, 16, %s423, %s414
        %s426 = sadd.s32 %s140, 12
        %s427 = sshra.s32 %s426, 7
        %s428 = sand.u32 %s426, 127
        %s429 = sadd.s32 %s427, %s26
        %s430 = smul.u32 %s429, 128
        %s431 = sshra.s32 %s426, 7
        %s432 = sand.u32 %s426, 127
        %s433 = sadd.s32 %s430, %s432
        %s434 = sld [smem:[#allocation5 + %s433]]
        %s435 = smul.addr %s434, 16
        %s436 = scalar_lea.hbm %s1, %s435
        %s437 = scalar_lea.vmem [#allocation2], 12
        %s438 = scalar_lea.sflag [#allocation3], 12
        // Predicated region
        $region77: #{tpu_custom_call.1} parent=23 // pred_check
          _
        $region78: #{tpu_custom_call.1} parent=23 // pred_check_branch
          %440 = sbr.rel target = $region80
        $region79: #{tpu_custom_call.1} parent=23 // pred_region
          %441 = sst [smem:[#allocation12]] [#allocation37]
          %442 = sst [smem:[#allocation13]] [#allocation36]
        $region80: #{tpu_custom_call.1} parent=23 // pred_fallthru
          _
        %444 = shalt.err (0)
        %s446 = sshll.u32 %s437, 4
        %s447 = int_to_ptr.vmem [resolvable:$true] %s446
        %449 = dma.hbm_to_vmem [thread:$0]  %s436, 16, %s447, %s438
        %s450 = sadd.s32 %s140, 13
        %s451 = sshra.s32 %s450, 7
        %s452 = sand.u32 %s450, 127
        %s453 = sadd.s32 %s451, %s26
        %s454 = smul.u32 %s453, 128
        %s455 = sshra.s32 %s450, 7
        %s456 = sand.u32 %s450, 127
        %s457 = sadd.s32 %s454, %s456
        %s458 = sld [smem:[#allocation5 + %s457]]
        %s459 = smul.addr %s458, 16
        %s460 = scalar_lea.hbm %s1, %s459
        %s461 = scalar_lea.vmem [#allocation2], 13
        %s462 = scalar_lea.sflag [#allocation3], 13
        // Predicated region
        $region81: #{tpu_custom_call.1} parent=23 // pred_check
          _
        $region82: #{tpu_custom_call.1} parent=23 // pred_check_branch
          %464 = sbr.rel target = $region84
        $region83: #{tpu_custom_call.1} parent=23 // pred_region
          %465 = sst [smem:[#allocation12]] [#allocation39]
          %466 = sst [smem:[#allocation13]] [#allocation38]
        $region84: #{tpu_custom_call.1} parent=23 // pred_fallthru
          _
        %468 = shalt.err (0)
        %s470 = sshll.u32 %s461, 4
        %s471 = int_to_ptr.vmem [resolvable:$true] %s470
        %473 = dma.hbm_to_vmem [thread:$0]  %s460, 16, %s471, %s462
        %s474 = sadd.s32 %s140, 14
        %s475 = sshra.s32 %s474, 7
        %s476 = sand.u32 %s474, 127
        %s477 = sadd.s32 %s475, %s26
        %s478 = smul.u32 %s477, 128
        %s479 = sshra.s32 %s474, 7
        %s480 = sand.u32 %s474, 127
        %s481 = sadd.s32 %s478, %s480
        %s482 = sld [smem:[#allocation5 + %s481]]
        %s483 = smul.addr %s482, 16
        %s484 = scalar_lea.hbm %s1, %s483
        %s485 = scalar_lea.vmem [#allocation2], 14
        %s486 = scalar_lea.sflag [#allocation3], 14
        // Predicated region
        $region85: #{tpu_custom_call.1} parent=23 // pred_check
          _
        $region86: #{tpu_custom_call.1} parent=23 // pred_check_branch
          %488 = sbr.rel target = $region88
        $region87: #{tpu_custom_call.1} parent=23 // pred_region
          %489 = sst [smem:[#allocation12]] [#allocation41]
          %490 = sst [smem:[#allocation13]] [#allocation40]
        $region88: #{tpu_custom_call.1} parent=23 // pred_fallthru
          _
        %492 = shalt.err (0)
        %s494 = sshll.u32 %s485, 4
        %s495 = int_to_ptr.vmem [resolvable:$true] %s494
        %497 = dma.hbm_to_vmem [thread:$0]  %s484, 16, %s495, %s486
        %s498 = sadd.s32 %s140, 15
        %s499 = sshra.s32 %s498, 7
        %s500 = sand.u32 %s498, 127
        %s501 = sadd.s32 %s499, %s26
        %s502 = smul.u32 %s501, 128
        %s503 = sshra.s32 %s498, 7
        %s504 = sand.u32 %s498, 127
        %s505 = sadd.s32 %s502, %s504
        %s506 = sld [smem:[#allocation5 + %s505]]
        %s507 = smul.addr %s506, 16
        %s508 = scalar_lea.hbm %s1, %s507
        %s509 = scalar_lea.vmem [#allocation2], 15
        %s510 = scalar_lea.sflag [#allocation3], 15
        // Predicated region
        $region89: #{tpu_custom_call.1} parent=23 // pred_check
          _
        $region90: #{tpu_custom_call.1} parent=23 // pred_check_branch
          %512 = sbr.rel target = $region92
        $region91: #{tpu_custom_call.1} parent=23 // pred_region
          %513 = sst [smem:[#allocation12]] [#allocation43]
          %514 = sst [smem:[#allocation13]] [#allocation42]
        $region92: #{tpu_custom_call.1} parent=23 // pred_fallthru
          _
        %516 = shalt.err (0)
        %s518 = sshll.u32 %s509, 4
        %s519 = int_to_ptr.vmem [resolvable:$true] %s518
        %521 = dma.hbm_to_vmem [thread:$0]  %s508, 16, %s519, %s510
        %s522 = smul.u32 1, 1
        %s523 = sshll.u32 %s522, 4
        %524 = dma.done [#allocation3], %s523
        %s525 = sshll.u32 %s522, 4
        %526 = dma.done %s174, %s525
        %s527 = sshll.u32 %s522, 4
        %528 = dma.done %s198, %s527
        %s529 = sshll.u32 %s522, 4
        %530 = dma.done %s222, %s529
        %s531 = sshll.u32 %s522, 4
        %532 = dma.done %s246, %s531
        %s533 = sshll.u32 %s522, 4
        %534 = dma.done %s270, %s533
        %s535 = sshll.u32 %s522, 4
        %536 = dma.done %s294, %s535
        %s537 = sshll.u32 %s522, 4
        %538 = dma.done %s318, %s537
        %s539 = sshll.u32 %s522, 4
        %540 = dma.done %s342, %s539
        %s541 = sshll.u32 %s522, 4
        %542 = dma.done %s366, %s541
        %s543 = sshll.u32 %s522, 4
        %544 = dma.done %s390, %s543
        %s545 = sshll.u32 %s522, 4
        %546 = dma.done %s414, %s545
        %s547 = sshll.u32 %s522, 4
        %548 = dma.done %s438, %s547
        %s549 = sshll.u32 %s522, 4
        %550 = dma.done %s462, %s549
        %s551 = sshll.u32 %s522, 4
        %552 = dma.done %s486, %s551
        %s553 = sshll.u32 %s522, 4
        %554 = dma.done %s510, %s553
        %v555 = vld [vmem:[#allocation2] sm:$0xff]
        %v556 = vld [vmem:[#allocation2 + $0x8] sm:$0xff]
        %v557 = vld [vmem:[#allocation6] sm:$0xff]
        %v558 = vld [vmem:[#allocation6 + $0x8] sm:$0xff]
        %v559 = vadd.f32 %v555, %v557
        %v560 = vadd.f32 %v556, %v558
        %561 = vst [vmem:[%s137] sm:$0xff] %v559
        %562 = vst [vmem:[%s137 + $0x8] sm:$0xff] %v560
        %s563 = sand.u32 %s70, 1
        %s564 = scalar_lea.sflag [#allocation8], %s563
        %s565 = sand.u32 %s70, 1
        %s566 = smul.addr %s565, 16
        %s567 = scalar_lea.vmem [#allocation9], %s566
        // Predicated region
        $region93: #{tpu_custom_call.1} parent=23 // pred_check
          %p568 = pneg %p80
        $region94: #{tpu_custom_call.1} parent=23 // pred_check_branch
          %570 = sbr.rel (%p568) target = $region96
        $region95: #{tpu_custom_call.1} parent=23 // pred_region
          %s571 = smul.u32 2, %s27
          %s573 = ssub.s32 256, 256
          %574 = vsyncadd %s564, %s573
          %s575 = smul.addr %s26, 2
          %s576 = sadd.s32 %s571, %s575
          %s577 = smul.addr %s576, 128
          %s578 = scalar_lea.hbm %s3, %s577
          %s579 = sshll.u32 %s567, 4
          %s580 = int_to_ptr.vmem [resolvable:$true] %s579
          %585 = dma.vmem_to_hbm [thread:$0]  %s580, 256, %s578, %s564, 128, 128, 8
        $region96: #{tpu_custom_call.1} parent=23 // pred_fallthru
          _
      $region24: #{tpu_custom_call.1} parent=5 // pred_fallthru
        _
      %p586 = scmp.le.s32.totalorder 2, %s17
      // Predicated region
      $region97: #{tpu_custom_call.1} parent=5 // pred_check
        %p587 = pneg %p586
      $region98: #{tpu_custom_call.1} parent=5 // pred_check_branch
        %589 = sbr.rel (%p587) target = $region100
      $region99: #{tpu_custom_call.1} parent=5 // pred_region
        %s590 = ssub.s32 %s17, 2
        // Predicated region
        $region101: #{tpu_custom_call.1} parent=99 // pred_check
          %p591 = pneg %p86
        $region102: #{tpu_custom_call.1} parent=99 // pred_check_branch
          %593 = sbr.rel (%p591) target = $region104
        $region103: #{tpu_custom_call.1} parent=99 // pred_region
          %s594 = sand.u32 %s71, 1
          %s595 = scalar_lea.sflag [#allocation8], %s594
          %s596 = sand.u32 %s71, 1
          %s597 = smul.addr %s596, 16
          %s598 = scalar_lea.vmem [#allocation9], %s597
          %599 = dma.done %s595, 256
        $region104: #{tpu_custom_call.1} parent=99 // pred_fallthru
          _
      $region100: #{tpu_custom_call.1} parent=5 // pred_fallthru
        _
    $region6: #{tpu_custom_call.1} parent=1 // loop_footer
      %s21 = sadd.s32 1, %s17
    $region7: #{tpu_custom_call.1} parent=1 // loop_footer_branch
      %16 = sbr.rel target = $region3
    $region8: #{tpu_custom_call.1} parent=1 // loop_exit
      _
    %600 = vsyncpa [#allocation7], 1
    %s601 = scalar_lea.sflag [#allocation7], 1
    %602 = vsyncpa %s601, 1
    %603 = vsyncpa [#allocation8], 1
    %s604 = scalar_lea.sflag [#allocation8], 1
    %605 = vsyncpa %s604, 1
  %606 = vsyncmov [#allocation3]
  %s607 = vpop.sfrf %606
  %p608 = scmp.eq.s32.totalorder %s607, 0
  %p609 = pneg %p608
  %611 = shalt.err (%p609)
  %s612 = scalar_lea.sflag [#allocation3], 1
  %613 = vsyncmov %s612
  %s614 = vpop.sfrf %613
  %p615 = scmp.eq.s32.totalorder %s614, 0
  %p616 = pneg %p615
  %618 = shalt.err (%p616)
  %s619 = scalar_lea.sflag [#allocation3], 2
  %620 = vsyncmov %s619
  %s621 = vpop.sfrf %620
  %p622 = scmp.eq.s32.totalorder %s621, 0
  %p623 = pneg %p622
  %625 = shalt.err (%p623)
  %s626 = scalar_lea.sflag [#allocation3], 3
  %627 = vsyncmov %s626
  %s628 = vpop.sfrf %627
  %p629 = scmp.eq.s32.totalorder %s628, 0
  %p630 = pneg %p629
  %632 = shalt.err (%p630)
  %s633 = scalar_lea.sflag [#allocation3], 4
  %634 = vsyncmov %s633
  %s635 = vpop.sfrf %634
  %p636 = scmp.eq.s32.totalorder %s635, 0
  %p637 = pneg %p636
  %639 = shalt.err (%p637)
  %s640 = scalar_lea.sflag [#allocation3], 5
  %641 = vsyncmov %s640
  %s642 = vpop.sfrf %641
  %p643 = scmp.eq.s32.totalorder %s642, 0
  %p644 = pneg %p643
  %646 = shalt.err (%p644)
  %s647 = scalar_lea.sflag [#allocation3], 6
  %648 = vsyncmov %s647
  %s649 = vpop.sfrf %648
  %p650 = scmp.eq.s32.totalorder %s649, 0
  %p651 = pneg %p650
  %653 = shalt.err (%p651)
  %s654 = scalar_lea.sflag [#allocation3], 7
  %655 = vsyncmov %s654
  %s656 = vpop.sfrf %655
  %p657 = scmp.eq.s32.totalorder %s656, 0
  %p658 = pneg %p657
  %660 = shalt.err (%p658)
  %s661 = scalar_lea.sflag [#allocation3], 8
  %662 = vsyncmov %s661
  %s663 = vpop.sfrf %662
  %p664 = scmp.eq.s32.totalorder %s663, 0
  %p665 = pneg %p664
  %667 = shalt.err (%p665)
  %s668 = scalar_lea.sflag [#allocation3], 9
  %669 = vsyncmov %s668
  %s670 = vpop.sfrf %669
  %p671 = scmp.eq.s32.totalorder %s670, 0
  %p672 = pneg %p671
  %674 = shalt.err (%p672)
  %s675 = scalar_lea.sflag [#allocation3], 10
  %676 = vsyncmov %s675
  %s677 = vpop.sfrf %676
  %p678 = scmp.eq.s32.totalorder %s677, 0
  %p679 = pneg %p678
  %681 = shalt.err (%p679)
  %s682 = scalar_lea.sflag [#allocation3], 11
  %683 = vsyncmov %s682
  %s684 = vpop.sfrf %683
  %p685 = scmp.eq.s32.totalorder %s684, 0
  %p686 = pneg %p685
  %688 = shalt.err (%p686)
  %s689 = scalar_lea.sflag [#allocation3], 12
  %690 = vsyncmov %s689
  %s691 = vpop.sfrf %690
  %p692 = scmp.eq.s32.totalorder %s691, 0
  %p693 = pneg %p692
  %695 = shalt.err (%p693)
  %s696 = scalar_lea.sflag [#allocation3], 13
  %697 = vsyncmov %s696
  %s698 = vpop.sfrf %697
  %p699 = scmp.eq.s32.totalorder %s698, 0
  %p700 = pneg %p699
  %702 = shalt.err (%p700)
  %s703 = scalar_lea.sflag [#allocation3], 14
  %704 = vsyncmov %s703
  %s705 = vpop.sfrf %704
  %p706 = scmp.eq.s32.totalorder %s705, 0
  %p707 = pneg %p706
  %709 = shalt.err (%p707)
  %s710 = scalar_lea.sflag [#allocation3], 15
  %711 = vsyncmov %s710
  %s712 = vpop.sfrf %711
  %p713 = scmp.eq.s32.totalorder %s712, 0
  %p714 = pneg %p713
  %716 = shalt.err (%p714)

</llo_original>
